<compile_context>
chip_gen: v7x
topology: tpu7x:2x2x1
jax: 0.10.0
libtpu: 0.0.40
codegen_flags: <defaults>
</compile_context>

<pallas_src>
import functools

import jax
import jax.numpy as jnp
from jax import lax
from jax.experimental import pallas as pl
from jax.experimental.pallas import tpu as pltpu


def _round_up(x, m):
    return (x + m - 1) // m * m


def _cross_attn_kernel(xe_ref, xd_ref,
                       wq_ref, bq_ref,
                       wk_ref, bk_ref,
                       wv_ref, bv_ref,
                       wp_ref, bp_ref,
                       o_ref,
                       k_slab, v_slab, o_slab,
                       *, num_heads, dpad):
    attn_dtype = k_slab.dtype   # compute dtype for MXU operands (f32 accumulate)

    # ---- K / V for this batch element: computed once on the first dec tile,
    # then kept VMEM-resident across all decoder tiles of the same batch. ----
    @pl.when(pl.program_id(1) == 0)
    def _():
        xe = xe_ref[0]                                     # (T_enc, in_enc_dim)
        k = jnp.dot(xe, wk_ref[...],
                    preferred_element_type=jnp.float32) + bk_ref[...]
        v = jnp.dot(xe, wv_ref[...],
                    preferred_element_type=jnp.float32) + bv_ref[...]
        k_slab[...] = k.astype(attn_dtype)
        v_slab[...] = v.astype(attn_dtype)

    # ---- Q for this (batch, dec-tile).  1/sqrt(qk_dim) is already folded
    # into Wq / bq at the call boundary. ----
    xd = xd_ref[0]                                         # (TQ, in_dec_dim)
    q = (jnp.dot(xd, wq_ref[...], preferred_element_type=jnp.float32)
         + bq_ref[...]).astype(attn_dtype)                 # (TQ, H*dpad)

    # ---- Per-head attention on lane-aligned (128-multiple) head blocks. ----
    for h in range(num_heads):                             # static unroll, H small
        lo, hi = h * dpad, (h + 1) * dpad
        qh = q[:, lo:hi]                                   # (TQ, dpad)
        kh = k_slab[:, lo:hi]                              # (T_enc, dpad)
        vh = v_slab[:, lo:hi]                              # (T_enc, dpad)

        # Q @ K^T with trans-B contraction dims (no XLU transpose of K).
        s = lax.dot_general(qh, kh, (((1,), (1,)), ((), ())),
                            preferred_element_type=jnp.float32)   # (TQ, T_enc)

        # Numerically stable softmax over the encoder axis, kept in float32.
        s = s - jnp.max(s, axis=-1, keepdims=True)
        p = jnp.exp(s)
        inv_denom = pl.reciprocal(jnp.sum(p, axis=-1, keepdims=True), approx=True)
        pn = (p * inv_denom).astype(attn_dtype)

        # Write this head's output straight into the lane slab (no concat;
        # bounds the live range of the per-head temporaries).
        o_slab[:, lo:hi] = jnp.dot(
            pn, vh, preferred_element_type=jnp.float32).astype(attn_dtype)

    # ---- One fused output projection off the slab, single final store. ----
    out = jnp.dot(o_slab[...], wp_ref[...],
                  preferred_element_type=jnp.float32) + bp_ref[...]
    o_ref[0] = out.astype(o_ref.dtype)


def cross_attention(x_enc, x_dec, params, num_heads, *,
                    compute_dtype=jnp.float32, out_dtype=None, dec_tile=256):
    """Pallas implementation of CrossAttention.forward (eval mode)."""
    B, T_dec, in_dec_dim = x_dec.shape
    _, T_enc, in_enc_dim = x_enc.shape
    wq, bq, wk, bk, wv, bv, wp, bp = params
    hdk = wq.shape[-1]                     # H * qk_dim
    qk_dim = hdk // num_heads
    if out_dtype is None:
        out_dtype = compute_dtype

    # Pad each head's lane block to a multiple of 128 so per-head slices /
    # slab writes never cross an (8,128) vreg tile.  Padded Q/K/V columns and
    # Wproj rows are zero, so the math is exactly unchanged.
    dpad = _round_up(qk_dim, 128)
    hdk_pad = num_heads * dpad
    scale = float(qk_dim) ** -0.5

    def pad_heads_out(w, b, extra_scale=1.0):
        in_dim = w.shape[0]
        w3 = (w * extra_scale).reshape(in_dim, num_heads, qk_dim)
        w3 = jnp.pad(w3, ((0, 0), (0, 0), (0, dpad - qk_dim)))
        b2 = (b * extra_scale).reshape(num_heads, qk_dim)
        b2 = jnp.pad(b2, ((0, 0), (0, dpad - qk_dim)))
        return (w3.reshape(in_dim, hdk_pad).astype(compute_dtype),
                b2.reshape(1, hdk_pad).astype(jnp.float32))

    # 1/sqrt(qk_dim) folded into the Q projection (weight AND bias).
    wq_p, bq_p = pad_heads_out(wq, bq, extra_scale=scale)
    wk_p, bk_p = pad_heads_out(wk, bk)
    wv_p, bv_p = pad_heads_out(wv, bv)

    wp3 = wp.reshape(num_heads, qk_dim, in_dec_dim)
    wp3 = jnp.pad(wp3, ((0, 0), (0, dpad - qk_dim), (0, 0)))   # zero padded rows
    wp_p = wp3.reshape(hdk_pad, in_dec_dim).astype(compute_dtype)
    bp_p = bp.reshape(1, in_dec_dim).astype(jnp.float32)

    x_enc_c = x_enc.astype(compute_dtype)
    x_dec_c = x_dec.astype(compute_dtype)

    # Decoder-sequence tiling.
    tq = T_dec if T_dec <= dec_tile else dec_tile
    n_dec_tiles = pl.cdiv(T_dec, tq)
    grid = (B, n_dec_tiles)

    def wspec(r, c):
        # Constant block index -> fetched once, VMEM-resident for the whole grid.
        return pl.BlockSpec((r, c), lambda b, t: (0, 0))

    kernel = functools.partial(_cross_attn_kernel,
                               num_heads=num_heads, dpad=dpad)

    # Advisory cost estimate so XLA overlaps surrounding ops with the kernel.
    flops = 2 * B * (T_dec * in_dec_dim * hdk_pad              # Q projection
                     + 2 * T_enc * in_enc_dim * hdk_pad        # K, V projections
                     + 2 * num_heads * T_dec * T_enc * dpad    # QK^T + PV
                     + T_dec * hdk_pad * in_dec_dim)           # output projection
    transcendentals = B * num_heads * T_dec * T_enc
    bytes_accessed = (x_enc_c.size * x_enc_c.dtype.itemsize
                      + x_dec_c.size * x_dec_c.dtype.itemsize
                      + B * T_dec * in_dec_dim * jnp.dtype(out_dtype).itemsize
                      + sum(a.size * a.dtype.itemsize
                            for a in (wq_p, wk_p, wv_p, wp_p,
                                      bq_p, bk_p, bv_p, bp_p)))

    out = pl.pallas_call(
        kernel,
        out_shape=jax.ShapeDtypeStruct((B, T_dec, in_dec_dim), out_dtype),
        grid_spec=pltpu.PrefetchScalarGridSpec(
            num_scalar_prefetch=0,
            grid=grid,
            in_specs=[
                pl.BlockSpec((1, T_enc, in_enc_dim), lambda b, t: (b, 0, 0)),  # x_enc
                pl.BlockSpec((1, tq, in_dec_dim), lambda b, t: (b, t, 0)),     # x_dec
                wspec(in_dec_dim, hdk_pad),    # Wq (scale folded, head-padded)
                wspec(1, hdk_pad),             # bq (scale folded)
                wspec(in_enc_dim, hdk_pad),    # Wk
                wspec(1, hdk_pad),             # bk
                wspec(in_enc_dim, hdk_pad),    # Wv
                wspec(1, hdk_pad),             # bv
                wspec(hdk_pad, in_dec_dim),    # Wproj (zero-padded rows)
                wspec(1, in_dec_dim),          # bproj
            ],
            out_specs=pl.BlockSpec((1, tq, in_dec_dim), lambda b, t: (b, t, 0)),
            scratch_shapes=[
                pltpu.VMEM((T_enc, hdk_pad), compute_dtype),   # K slab (per batch)
                pltpu.VMEM((T_enc, hdk_pad), compute_dtype),   # V slab (per batch)
                pltpu.VMEM((tq, hdk_pad), compute_dtype),      # per-head output slab
            ],
        ),
        compiler_params=pltpu.CompilerParams(
            # dec-tile axis carries the K/V scratch across steps -> "arbitrary";
            # batch axis is independent -> "parallel" (v7x megacore sharding).
            dimension_semantics=("parallel", "arbitrary"),
            vmem_limit_bytes=64 * 1024 * 1024,
        ),
        cost_estimate=pl.CostEstimate(flops=flops,
                                      transcendentals=transcendentals,
                                      bytes_accessed=bytes_accessed),
    )(x_enc_c, x_dec_c, wq_p, bq_p, wk_p, bk_p, wv_p, bv_p, wp_p, bp_p)
    return out


def init_params(key, in_enc_dim, in_dec_dim, qk_dim, num_heads):
    """Deterministic synthetic parameters in fused (in, out) layout."""
    ks = jax.random.split(key, 8)
    H = num_heads
    wq = jax.random.normal(ks[0], (in_dec_dim, H * qk_dim), jnp.float32) * 0.05
    bq = jax.random.normal(ks[1], (H * qk_dim,), jnp.float32) * 0.05
    wk = jax.random.normal(ks[2], (in_enc_dim, H * qk_dim), jnp.float32) * 0.05
    bk = jax.random.normal(ks[3], (H * qk_dim,), jnp.float32) * 0.05
    wv = jax.random.normal(ks[4], (in_enc_dim, H * qk_dim), jnp.float32) * 0.05
    bv = jax.random.normal(ks[5], (H * qk_dim,), jnp.float32) * 0.05
    wp = jax.random.normal(ks[6], (H * qk_dim, in_dec_dim), jnp.float32) * 0.05
    bp = jax.random.normal(ks[7], (in_dec_dim,), jnp.float32) * 0.05
    return (wq, bq, wk, bk, wv, bv, wp, bp)


def reference_cross_attention(x_enc, x_dec, params, num_heads):
    """Pure-JAX reference mirroring the PyTorch forward (eval mode)."""
    wq, bq, wk, bk, wv, bv, wp, bp = params
    B, T_dec, _ = x_dec.shape
    _, T_enc, _ = x_enc.shape
    H = num_heads
    q = (x_dec @ wq + bq).reshape(B, T_dec, H, -1).transpose(0, 2, 1, 3)
    k = (x_enc @ wk + bk).reshape(B, T_enc, H, -1).transpose(0, 2, 1, 3)
    v = (x_enc @ wv + bv).reshape(B, T_enc, H, -1).transpose(0, 2, 1, 3)
    att = jnp.einsum("bhqd,bhkd->bhqk", q, k) * (q.shape[-1] ** -0.5)
    att = jax.nn.softmax(att, axis=-1)
    o = jnp.einsum("bhqk,bhkd->bhqd", att, v)
    o = o.transpose(0, 2, 1, 3).reshape(B, T_dec, -1)
    return o @ wp + bp


if __name__ == "__main__":
    B = 2
    T_enc = 8
    T_dec = 8
    in_enc_dim = 16
    in_dec_dim = 16
    qk_dim = 8
    num_heads = 4

    key = jax.random.PRNGKey(0)
    k_enc, k_dec, k_par = jax.random.split(key, 3)
    x_enc = jax.random.normal(k_enc, (B, T_enc, in_enc_dim), jnp.float32)
    x_dec = jax.random.normal(k_dec, (B, T_dec, in_dec_dim), jnp.float32)

    params = init_params(k_par, in_enc_dim, in_dec_dim, qk_dim, num_heads)
    ref = reference_cross_attention(x_enc, x_dec, params, num_heads)

    # float32 path (tight tolerance; approx reciprocal is the only deviation).
    out_f32 = cross_attention(x_enc, x_dec, params, num_heads,
                              compute_dtype=jnp.float32)
    out_f32 = jax.block_until_ready(out_f32)
    assert out_f32.shape == (B, T_dec, in_dec_dim)
    assert jnp.allclose(out_f32, ref, atol=1e-3, rtol=1e-3), "f32 mismatch vs reference"

    # bfloat16 path: bf16 operands on ALL matmuls (projections + QK^T + PV),
    # f32 accumulation and f32 softmax, bf16 output (halved HBM writeback).
    out_bf16 = cross_attention(x_enc, x_dec, params, num_heads,
                               compute_dtype=jnp.bfloat16)
    out_bf16 = jax.block_until_ready(out_bf16)
    assert out_bf16.dtype == jnp.bfloat16
    assert jnp.allclose(out_bf16.astype(jnp.float32), ref,
                        atol=5e-2, rtol=5e-2), "bf16 mismatch vs reference"

    print("KERNEL_OK")
</pallas_src>

<mosaic_0001>
module attributes {stable_mosaic.version = 11 : i64} {
  func.func @_cross_attn_kernel(%arg0: i32, %arg1: i32, %arg2: memref<1x8x16xf32, #tpu.memory_space<vmem>>, %arg3: memref<1x8x16xf32, #tpu.memory_space<vmem>>, %arg4: memref<16x512xf32, #tpu.memory_space<vmem>>, %arg5: memref<1x512xf32, #tpu.memory_space<vmem>>, %arg6: memref<16x512xf32, #tpu.memory_space<vmem>>, %arg7: memref<1x512xf32, #tpu.memory_space<vmem>>, %arg8: memref<16x512xf32, #tpu.memory_space<vmem>>, %arg9: memref<1x512xf32, #tpu.memory_space<vmem>>, %arg10: memref<512x16xf32, #tpu.memory_space<vmem>>, %arg11: memref<1x16xf32, #tpu.memory_space<vmem>>, %arg12: memref<1x8x16xf32, #tpu.memory_space<vmem>>, %arg13: memref<8x512xf32, #tpu.memory_space<vmem>>, %arg14: memref<8x512xf32, #tpu.memory_space<vmem>>, %arg15: memref<8x512xf32, #tpu.memory_space<vmem>>) attributes {dimension_semantics = [#tpu.dimension_semantics<parallel>, #tpu.dimension_semantics<arbitrary>], iteration_bounds = array<i64: 2, 1>, scalar_prefetch = 0 : i64, scratch_operands = 3 : i64, tpu.core_type = #tpu.core_type<tc>, window_params = [{transform_indices = @transform_0, window_bounds = array<i64: 1, 8, 16>}, {transform_indices = @transform_1, window_bounds = array<i64: 1, 8, 16>}, {pipeline_mode = #tpu.pipeline_mode<synchronous>, transform_indices = @transform_2, window_bounds = array<i64: 16, 512>}, {pipeline_mode = #tpu.pipeline_mode<synchronous>, transform_indices = @transform_3, window_bounds = array<i64: 1, 512>}, {pipeline_mode = #tpu.pipeline_mode<synchronous>, transform_indices = @transform_4, window_bounds = array<i64: 16, 512>}, {pipeline_mode = #tpu.pipeline_mode<synchronous>, transform_indices = @transform_5, window_bounds = array<i64: 1, 512>}, {pipeline_mode = #tpu.pipeline_mode<synchronous>, transform_indices = @transform_6, window_bounds = array<i64: 16, 512>}, {pipeline_mode = #tpu.pipeline_mode<synchronous>, transform_indices = @transform_7, window_bounds = array<i64: 1, 512>}, {pipeline_mode = #tpu.pipeline_mode<synchronous>, transform_indices = @transform_8, window_bounds = array<i64: 512, 16>}, {pipeline_mode = #tpu.pipeline_mode<synchronous>, transform_indices = @transform_9, window_bounds = array<i64: 1, 16>}, {transform_indices = @transform_10, window_bounds = array<i64: 1, 8, 16>}]} {
    %c0_i32 = arith.constant 0 : i32
    %0 = arith.cmpi eq, %arg1, %c0_i32 : i32
    %1 = arith.extui %0 : i1 to i32
    %c0_i32_0 = arith.constant 0 : i32
    %2 = arith.cmpi ne, %1, %c0_i32_0 : i32
    scf.if %2 {
      %c0_54 = arith.constant 0 : index
      %c0_55 = arith.constant 0 : index
      %c0_56 = arith.constant 0 : index
      %83 = vector.load %arg2[%c0_54, %c0_55, %c0_56] : memref<1x8x16xf32, #tpu.memory_space<vmem>>, vector<1x8x16xf32>
      %84 = vector.shape_cast %83 : vector<1x8x16xf32> to vector<8x16xf32>
      %c0_57 = arith.constant 0 : index
      %c0_58 = arith.constant 0 : index
      %85 = vector.load %arg6[%c0_57, %c0_58] : memref<16x512xf32, #tpu.memory_space<vmem>>, vector<16x512xf32>
      %cst_59 = arith.constant dense<0.000000e+00> : vector<8x512xf32>
      %86 = tpu.matmul %84, %85, %cst_59 {dimension_numbers = #tpu.dot_dimension_numbers<[1], [0], [0], [1], [0, 0, 1, 1], [], []>} : vector<8x16xf32>, vector<16x512xf32>, vector<8x512xf32> -> vector<8x512xf32>
      %c0_60 = arith.constant 0 : index
      %c0_61 = arith.constant 0 : index
      %87 = vector.load %arg7[%c0_60, %c0_61] : memref<1x512xf32, #tpu.memory_space<vmem>>, vector<1x512xf32>
      %88 = vector.broadcast %87 : vector<1x512xf32> to vector<8x512xf32>
      %89 = arith.addf %86, %88 : vector<8x512xf32>
      %c0_62 = arith.constant 0 : index
      %c0_63 = arith.constant 0 : index
      %90 = vector.load %arg8[%c0_62, %c0_63] : memref<16x512xf32, #tpu.memory_space<vmem>>, vector<16x512xf32>
      %cst_64 = arith.constant dense<0.000000e+00> : vector<8x512xf32>
      %91 = tpu.matmul %84, %90, %cst_64 {dimension_numbers = #tpu.dot_dimension_numbers<[1], [0], [0], [1], [0, 0, 1, 1], [], []>} : vector<8x16xf32>, vector<16x512xf32>, vector<8x512xf32> -> vector<8x512xf32>
      %c0_65 = arith.constant 0 : index
      %c0_66 = arith.constant 0 : index
      %92 = vector.load %arg9[%c0_65, %c0_66] : memref<1x512xf32, #tpu.memory_space<vmem>>, vector<1x512xf32>
      %93 = vector.broadcast %92 : vector<1x512xf32> to vector<8x512xf32>
      %94 = arith.addf %91, %93 : vector<8x512xf32>
      %c0_67 = arith.constant 0 : index
      %c0_68 = arith.constant 0 : index
      %95 = vector.load %arg13[%c0_67, %c0_68] : memref<8x512xf32, #tpu.memory_space<vmem>>, vector<8x512xf32>
      tpu.vector_store %arg13[%c0_67, %c0_68], %89 {strides = array<i32>} : memref<8x512xf32, #tpu.memory_space<vmem>>, vector<8x512xf32>,
      %c0_69 = arith.constant 0 : index
      %c0_70 = arith.constant 0 : index
      %96 = vector.load %arg14[%c0_69, %c0_70] : memref<8x512xf32, #tpu.memory_space<vmem>>, vector<8x512xf32>
      tpu.vector_store %arg14[%c0_69, %c0_70], %94 {strides = array<i32>} : memref<8x512xf32, #tpu.memory_space<vmem>>, vector<8x512xf32>,
    } else {
    }
    %c0 = arith.constant 0 : index
    %c0_1 = arith.constant 0 : index
    %c0_2 = arith.constant 0 : index
    %3 = vector.load %arg3[%c0, %c0_1, %c0_2] : memref<1x8x16xf32, #tpu.memory_space<vmem>>, vector<1x8x16xf32>
    %4 = vector.shape_cast %3 : vector<1x8x16xf32> to vector<8x16xf32>
    %c0_3 = arith.constant 0 : index
    %c0_4 = arith.constant 0 : index
    %5 = vector.load %arg4[%c0_3, %c0_4] : memref<16x512xf32, #tpu.memory_space<vmem>>, vector<16x512xf32>
    %cst = arith.constant dense<0.000000e+00> : vector<8x512xf32>
    %6 = tpu.matmul %4, %5, %cst {dimension_numbers = #tpu.dot_dimension_numbers<[1], [0], [0], [1], [0, 0, 1, 1], [], []>} : vector<8x16xf32>, vector<16x512xf32>, vector<8x512xf32> -> vector<8x512xf32>
    %c0_5 = arith.constant 0 : index
    %c0_6 = arith.constant 0 : index
    %7 = vector.load %arg5[%c0_5, %c0_6] : memref<1x512xf32, #tpu.memory_space<vmem>>, vector<1x512xf32>
    %8 = vector.broadcast %7 : vector<1x512xf32> to vector<8x512xf32>
    %9 = arith.addf %6, %8 : vector<8x512xf32>
    %10 = vector.extract_strided_slice %9 {offsets = [0, 0], sizes = [8, 128], strides = [1, 1]} : vector<8x512xf32> to vector<8x128xf32>
    %c0_7 = arith.constant 0 : index
    %c0_8 = arith.constant 0 : index
    %11 = vector.load %arg13[%c0_7, %c0_8] : memref<8x512xf32, #tpu.memory_space<vmem>>, vector<8x128xf32>
    %c0_9 = arith.constant 0 : index
    %c0_10 = arith.constant 0 : index
    %12 = vector.load %arg14[%c0_9, %c0_10] : memref<8x512xf32, #tpu.memory_space<vmem>>, vector<8x128xf32>
    %cst_11 = arith.constant dense<0.000000e+00> : vector<8x8xf32>
    %13 = tpu.matmul %10, %11, %cst_11 {dimension_numbers = #tpu.dot_dimension_numbers<[1], [1], [0], [0], [0, 0, 1, 0], [], []>} : vector<8x128xf32>, vector<8x128xf32>, vector<8x8xf32> -> vector<8x8xf32>
    %cst_12 = arith.constant dense<0xFF800000> : vector<8xf32>
    %14 = vector.multi_reduction <maximumf>, %13, %cst_12 [1] : vector<8x8xf32> to vector<8xf32>
    %15 = vector.shape_cast %14 : vector<8xf32> to vector<8x1xf32>
    %16 = vector.broadcast %15 : vector<8x1xf32> to vector<8x8xf32>
    %17 = arith.subf %13, %16 : vector<8x8xf32>
    %18 = math.exp %17 : vector<8x8xf32>
    %cst_13 = arith.constant dense<0.000000e+00> : vector<8xf32>
    %19 = vector.multi_reduction <add>, %18, %cst_13 [1] : vector<8x8xf32> to vector<8xf32>
    %20 = vector.shape_cast %19 : vector<8xf32> to vector<8x1xf32>
    %21 = tpu.reciprocal %20 {approx = true} : vector<8x1xf32> -> vector<8x1xf32>
    %22 = vector.broadcast %21 : vector<8x1xf32> to vector<8x8xf32>
    %23 = arith.mulf %18, %22 : vector<8x8xf32>
    %cst_14 = arith.constant dense<0.000000e+00> : vector<8x128xf32>
    %24 = tpu.matmul %23, %12, %cst_14 {dimension_numbers = #tpu.dot_dimension_numbers<[1], [0], [0], [1], [0, 0, 1, 1], [], []>} : vector<8x8xf32>, vector<8x128xf32>, vector<8x128xf32> -> vector<8x128xf32>
    %c0_15 = arith.constant 0 : index
    %c0_16 = arith.constant 0 : index
    %25 = vector.load %arg15[%c0_15, %c0_16] : memref<8x512xf32, #tpu.memory_space<vmem>>, vector<8x128xf32>
    tpu.vector_store %arg15[%c0_15, %c0_16], %24 {strides = array<i32>} : memref<8x512xf32, #tpu.memory_space<vmem>>, vector<8x128xf32>,
    %26 = vector.extract_strided_slice %9 {offsets = [0, 128], sizes = [8, 128], strides = [1, 1]} : vector<8x512xf32> to vector<8x128xf32>
    %c0_17 = arith.constant 0 : index
    %c128 = arith.constant 128 : index
    %27 = vector.load %arg13[%c0_17, %c128] : memref<8x512xf32, #tpu.memory_space<vmem>>, vector<8x128xf32>
    %c0_18 = arith.constant 0 : index
    %c128_19 = arith.constant 128 : index
    %28 = vector.load %arg14[%c0_18, %c128_19] : memref<8x512xf32, #tpu.memory_space<vmem>>, vector<8x128xf32>
    %cst_20 = arith.constant dense<0.000000e+00> : vector<8x8xf32>
    %29 = tpu.matmul %26, %27, %cst_20 {dimension_numbers = #tpu.dot_dimension_numbers<[1], [1], [0], [0], [0, 0, 1, 0], [], []>} : vector<8x128xf32>, vector<8x128xf32>, vector<8x8xf32> -> vector<8x8xf32>
    %cst_21 = arith.constant dense<0xFF800000> : vector<8xf32>
    %30 = vector.multi_reduction <maximumf>, %29, %cst_21 [1] : vector<8x8xf32> to vector<8xf32>
    %31 = vector.shape_cast %30 : vector<8xf32> to vector<8x1xf32>
    %32 = vector.broadcast %31 : vector<8x1xf32> to vector<8x8xf32>
    %33 = arith.subf %29, %32 : vector<8x8xf32>
    %34 = math.exp %33 : vector<8x8xf32>
    %cst_22 = arith.constant dense<0.000000e+00> : vector<8xf32>
    %35 = vector.multi_reduction <add>, %34, %cst_22 [1] : vector<8x8xf32> to vector<8xf32>
    %36 = vector.shape_cast %35 : vector<8xf32> to vector<8x1xf32>
    %37 = tpu.reciprocal %36 {approx = true} : vector<8x1xf32> -> vector<8x1xf32>
    %38 = vector.broadcast %37 : vector<8x1xf32> to vector<8x8xf32>
    %39 = arith.mulf %34, %38 : vector<8x8xf32>
    %cst_23 = arith.constant dense<0.000000e+00> : vector<8x128xf32>
    %40 = tpu.matmul %39, %28, %cst_23 {dimension_numbers = #tpu.dot_dimension_numbers<[1], [0], [0], [1], [0, 0, 1, 1], [], []>} : vector<8x8xf32>, vector<8x128xf32>, vector<8x128xf32> -> vector<8x128xf32>
    %c0_24 = arith.constant 0 : index
    %c128_25 = arith.constant 128 : index
    %41 = vector.load %arg15[%c0_24, %c128_25] : memref<8x512xf32, #tpu.memory_space<vmem>>, vector<8x128xf32>
    tpu.vector_store %arg15[%c0_24, %c128_25], %40 {strides = array<i32>} : memref<8x512xf32, #tpu.memory_space<vmem>>, vector<8x128xf32>,
    %42 = vector.extract_strided_slice %9 {offsets = [0, 256], sizes = [8, 128], strides = [1, 1]} : vector<8x512xf32> to vector<8x128xf32>
    %c0_26 = arith.constant 0 : index
    %c256 = arith.constant 256 : index
    %43 = vector.load %arg13[%c0_26, %c256] : memref<8x512xf32, #tpu.memory_space<vmem>>, vector<8x128xf32>
    %c0_27 = arith.constant 0 : index
    %c256_28 = arith.constant 256 : index
    %44 = vector.load %arg14[%c0_27, %c256_28] : memref<8x512xf32, #tpu.memory_space<vmem>>, vector<8x128xf32>
    %cst_29 = arith.constant dense<0.000000e+00> : vector<8x8xf32>
    %45 = tpu.matmul %42, %43, %cst_29 {dimension_numbers = #tpu.dot_dimension_numbers<[1], [1], [0], [0], [0, 0, 1, 0], [], []>} : vector<8x128xf32>, vector<8x128xf32>, vector<8x8xf32> -> vector<8x8xf32>
    %cst_30 = arith.constant dense<0xFF800000> : vector<8xf32>
    %46 = vector.multi_reduction <maximumf>, %45, %cst_30 [1] : vector<8x8xf32> to vector<8xf32>
    %47 = vector.shape_cast %46 : vector<8xf32> to vector<8x1xf32>
    %48 = vector.broadcast %47 : vector<8x1xf32> to vector<8x8xf32>
    %49 = arith.subf %45, %48 : vector<8x8xf32>
    %50 = math.exp %49 : vector<8x8xf32>
    %cst_31 = arith.constant dense<0.000000e+00> : vector<8xf32>
    %51 = vector.multi_reduction <add>, %50, %cst_31 [1] : vector<8x8xf32> to vector<8xf32>
    %52 = vector.shape_cast %51 : vector<8xf32> to vector<8x1xf32>
    %53 = tpu.reciprocal %52 {approx = true} : vector<8x1xf32> -> vector<8x1xf32>
    %54 = vector.broadcast %53 : vector<8x1xf32> to vector<8x8xf32>
    %55 = arith.mulf %50, %54 : vector<8x8xf32>
    %cst_32 = arith.constant dense<0.000000e+00> : vector<8x128xf32>
    %56 = tpu.matmul %55, %44, %cst_32 {dimension_numbers = #tpu.dot_dimension_numbers<[1], [0], [0], [1], [0, 0, 1, 1], [], []>} : vector<8x8xf32>, vector<8x128xf32>, vector<8x128xf32> -> vector<8x128xf32>
    %c0_33 = arith.constant 0 : index
    %c256_34 = arith.constant 256 : index
    %57 = vector.load %arg15[%c0_33, %c256_34] : memref<8x512xf32, #tpu.memory_space<vmem>>, vector<8x128xf32>
    tpu.vector_store %arg15[%c0_33, %c256_34], %56 {strides = array<i32>} : memref<8x512xf32, #tpu.memory_space<vmem>>, vector<8x128xf32>,
    %58 = vector.extract_strided_slice %9 {offsets = [0, 384], sizes = [8, 128], strides = [1, 1]} : vector<8x512xf32> to vector<8x128xf32>
    %c0_35 = arith.constant 0 : index
    %c384 = arith.constant 384 : index
    %59 = vector.load %arg13[%c0_35, %c384] : memref<8x512xf32, #tpu.memory_space<vmem>>, vector<8x128xf32>
    %c0_36 = arith.constant 0 : index
    %c384_37 = arith.constant 384 : index
    %60 = vector.load %arg14[%c0_36, %c384_37] : memref<8x512xf32, #tpu.memory_space<vmem>>, vector<8x128xf32>
    %cst_38 = arith.constant dense<0.000000e+00> : vector<8x8xf32>
    %61 = tpu.matmul %58, %59, %cst_38 {dimension_numbers = #tpu.dot_dimension_numbers<[1], [1], [0], [0], [0, 0, 1, 0], [], []>} : vector<8x128xf32>, vector<8x128xf32>, vector<8x8xf32> -> vector<8x8xf32>
    %cst_39 = arith.constant dense<0xFF800000> : vector<8xf32>
    %62 = vector.multi_reduction <maximumf>, %61, %cst_39 [1] : vector<8x8xf32> to vector<8xf32>
    %63 = vector.shape_cast %62 : vector<8xf32> to vector<8x1xf32>
    %64 = vector.broadcast %63 : vector<8x1xf32> to vector<8x8xf32>
    %65 = arith.subf %61, %64 : vector<8x8xf32>
    %66 = math.exp %65 : vector<8x8xf32>
    %cst_40 = arith.constant dense<0.000000e+00> : vector<8xf32>
    %67 = vector.multi_reduction <add>, %66, %cst_40 [1] : vector<8x8xf32> to vector<8xf32>
    %68 = vector.shape_cast %67 : vector<8xf32> to vector<8x1xf32>
    %69 = tpu.reciprocal %68 {approx = true} : vector<8x1xf32> -> vector<8x1xf32>
    %70 = vector.broadcast %69 : vector<8x1xf32> to vector<8x8xf32>
    %71 = arith.mulf %66, %70 : vector<8x8xf32>
    %cst_41 = arith.constant dense<0.000000e+00> : vector<8x128xf32>
    %72 = tpu.matmul %71, %60, %cst_41 {dimension_numbers = #tpu.dot_dimension_numbers<[1], [0], [0], [1], [0, 0, 1, 1], [], []>} : vector<8x8xf32>, vector<8x128xf32>, vector<8x128xf32> -> vector<8x128xf32>
    %c0_42 = arith.constant 0 : index
    %c384_43 = arith.constant 384 : index
    %73 = vector.load %arg15[%c0_42, %c384_43] : memref<8x512xf32, #tpu.memory_space<vmem>>, vector<8x128xf32>
    tpu.vector_store %arg15[%c0_42, %c384_43], %72 {strides = array<i32>} : memref<8x512xf32, #tpu.memory_space<vmem>>, vector<8x128xf32>,
    %c0_44 = arith.constant 0 : index
    %c0_45 = arith.constant 0 : index
    %74 = vector.load %arg15[%c0_44, %c0_45] : memref<8x512xf32, #tpu.memory_space<vmem>>, vector<8x512xf32>
    %c0_46 = arith.constant 0 : index
    %c0_47 = arith.constant 0 : index
    %75 = vector.load %arg10[%c0_46, %c0_47] : memref<512x16xf32, #tpu.memory_space<vmem>>, vector<512x16xf32>
    %cst_48 = arith.constant dense<0.000000e+00> : vector<8x16xf32>
    %76 = tpu.matmul %74, %75, %cst_48 {dimension_numbers = #tpu.dot_dimension_numbers<[1], [0], [0], [1], [0, 0, 1, 1], [], []>} : vector<8x512xf32>, vector<512x16xf32>, vector<8x16xf32> -> vector<8x16xf32>
    %c0_49 = arith.constant 0 : index
    %c0_50 = arith.constant 0 : index
    %77 = vector.load %arg11[%c0_49, %c0_50] : memref<1x16xf32, #tpu.memory_space<vmem>>, vector<1x16xf32>
    %78 = vector.broadcast %77 : vector<1x16xf32> to vector<8x16xf32>
    %79 = arith.addf %76, %78 : vector<8x16xf32>
    %c0_51 = arith.constant 0 : index
    %c0_52 = arith.constant 0 : index
    %c0_53 = arith.constant 0 : index
    %80 = vector.load %arg12[%c0_51, %c0_52, %c0_53] : memref<1x8x16xf32, #tpu.memory_space<vmem>>, vector<1x8x16xf32>
    %81 = vector.shape_cast %80 : vector<1x8x16xf32> to vector<8x16xf32>
    %82 = vector.shape_cast %79 : vector<8x16xf32> to vector<1x8x16xf32>
    tpu.vector_store %arg12[%c0_51, %c0_52, %c0_53], %82 {strides = array<i32>} : memref<1x8x16xf32, #tpu.memory_space<vmem>>, vector<1x8x16xf32>,
    return
  }
  func.func @transform_0(%arg0: i32, %arg1: i32) -> (i32, i32, i32) {
    %c0_i32 = arith.constant 0 : i32
    %c0_i32_0 = arith.constant 0 : i32
    %c0_i32_1 = arith.constant 0 : i32
    return %arg0, %c0_i32, %c0_i32_0 : i32, i32, i32
  }
  func.func @transform_1(%arg0: i32, %arg1: i32) -> (i32, i32, i32) {
    %c0_i32 = arith.constant 0 : i32
    %c0_i32_0 = arith.constant 0 : i32
    return %arg0, %arg1, %c0_i32 : i32, i32, i32
  }
  func.func @transform_2(%arg0: i32, %arg1: i32) -> (i32, i32) {
    %c0_i32 = arith.constant 0 : i32
    %c0_i32_0 = arith.constant 0 : i32
    %c0_i32_1 = arith.constant 0 : i32
    return %c0_i32, %c0_i32_0 : i32, i32
  }
  func.func @transform_3(%arg0: i32, %arg1: i32) -> (i32, i32) {
    %c0_i32 = arith.constant 0 : i32
    %c0_i32_0 = arith.constant 0 : i32
    %c0_i32_1 = arith.constant 0 : i32
    return %c0_i32, %c0_i32_0 : i32, i32
  }
  func.func @transform_4(%arg0: i32, %arg1: i32) -> (i32, i32) {
    %c0_i32 = arith.constant 0 : i32
    %c0_i32_0 = arith.constant 0 : i32
    %c0_i32_1 = arith.constant 0 : i32
    return %c0_i32, %c0_i32_0 : i32, i32
  }
  func.func @transform_5(%arg0: i32, %arg1: i32) -> (i32, i32) {
    %c0_i32 = arith.constant 0 : i32
    %c0_i32_0 = arith.constant 0 : i32
    %c0_i32_1 = arith.constant 0 : i32
    return %c0_i32, %c0_i32_0 : i32, i32
  }
  func.func @transform_6(%arg0: i32, %arg1: i32) -> (i32, i32) {
    %c0_i32 = arith.constant 0 : i32
    %c0_i32_0 = arith.constant 0 : i32
    %c0_i32_1 = arith.constant 0 : i32
    return %c0_i32, %c0_i32_0 : i32, i32
  }
  func.func @transform_7(%arg0: i32, %arg1: i32) -> (i32, i32) {
    %c0_i32 = arith.constant 0 : i32
    %c0_i32_0 = arith.constant 0 : i32
    %c0_i32_1 = arith.constant 0 : i32
    return %c0_i32, %c0_i32_0 : i32, i32
  }
  func.func @transform_8(%arg0: i32, %arg1: i32) -> (i32, i32) {
    %c0_i32 = arith.constant 0 : i32
    %c0_i32_0 = arith.constant 0 : i32
    %c0_i32_1 = arith.constant 0 : i32
    return %c0_i32, %c0_i32_0 : i32, i32
  }
  func.func @transform_9(%arg0: i32, %arg1: i32) -> (i32, i32) {
    %c0_i32 = arith.constant 0 : i32
    %c0_i32_0 = arith.constant 0 : i32
    %c0_i32_1 = arith.constant 0 : i32
    return %c0_i32, %c0_i32_0 : i32, i32
  }
  func.func @transform_10(%arg0: i32, %arg1: i32) -> (i32, i32, i32) {
    %c0_i32 = arith.constant 0 : i32
    %c0_i32_0 = arith.constant 0 : i32
    return %arg0, %arg1, %c0_i32 : i32, i32, i32
  }
}

</mosaic_0001>

<llo_original>
// kernel: tpu_custom_call.1
$region0: #{tpu_custom_call.1}
  #allocation0 [shape = 'u32[]', space=smem, size = 0x4, offset = 0x4, fixed_abs, tag = 'smem constant byte address 0x4 - core index']
  #allocation1 [shape = 'u32[144,128]{1,0:T(1,128)}', space=vmem, size = 0x12000, scoped, tag = 'internal scratch']
  #allocation2 [shape = 'f32[8,512]{1,0:T(8,128)}', space=vmem, size = 0x4000, scoped, tag = 'scratch operand']
  #allocation3 [shape = 'f32[8,512]{1,0:T(8,128)}', space=vmem, size = 0x4000, scoped, tag = 'scratch operand']
  #allocation4 [shape = 'f32[8,512]{1,0:T(8,128)}', space=vmem, size = 0x4000, scoped, tag = 'scratch operand']
  %s0 = inlined_call_operand.hbm [shape: f32[2,8,16], index: 0, kind: input, shape index: {}]
  %s1 = inlined_call_operand.hbm [shape: f32[2,8,16], index: 1, kind: input, shape index: {}]
  %s2 = inlined_call_operand.hbm [shape: f32[16,512], index: 2, kind: input, shape index: {}]
  %s3 = inlined_call_operand.hbm [shape: f32[1,512], index: 3, kind: input, shape index: {}]
  %s4 = inlined_call_operand.hbm [shape: f32[16,512], index: 4, kind: input, shape index: {}]
  %s5 = inlined_call_operand.hbm [shape: f32[1,512], index: 5, kind: input, shape index: {}]
  %s6 = inlined_call_operand.hbm [shape: f32[16,512], index: 6, kind: input, shape index: {}]
  %s7 = inlined_call_operand.hbm [shape: f32[1,512], index: 7, kind: input, shape index: {}]
  %s8 = inlined_call_operand.hbm [shape: f32[512,16], index: 8, kind: input, shape index: {}]
  %s9 = inlined_call_operand.hbm [shape: f32[1,16], index: 9, kind: input, shape index: {}]
  %s10 = inlined_call_operand.hbm [shape: f32[2,8,16], index: 10, kind: output, shape index: {}]
  %s11 = sld [smem:[#allocation0]]
  $region117: #{tpu_custom_call.1} parent=0
    _
  %s13 = ssub.s32 1, %s11
  %s14 = scalar_select 0, %s13, %s11
  $region1: #{tpu_custom_call.1} parent=0
    #allocation5 [shape = 'u8[8192]{0}', space=vmem, size = 0x2000, scoped, tag = 'input window, operand 0']
    #allocation6 [shape = 's32[2]{0}', space=sflag, size = 0x8, scoped, tag = 'scoped memory for tpu_custom_call.1']
    #allocation7 [shape = 's32[2]{0}', space=sflag, size = 0x8, scoped, tag = 'scoped memory for tpu_custom_call.1']
    #allocation8 [shape = 'u8[8192]{0}', space=vmem, size = 0x2000, scoped, tag = 'input window, operand 1']
    #allocation9 [shape = 's32[2]{0}', space=sflag, size = 0x8, scoped, tag = 'scoped memory for tpu_custom_call.1']
    #allocation10 [shape = 'u8[32768]{0}', space=vmem, size = 0x8000, scoped, tag = 'input window, operand 2, single buffered']
    #allocation11 [shape = 'u8[2048]{0}', space=vmem, size = 0x800, scoped, tag = 'input window, operand 3, single buffered']
    #allocation12 [shape = 's32[1]{0}', space=sflag, size = 0x4, scoped, tag = 'scoped memory for tpu_custom_call.1']
    #allocation13 [shape = 'u8[32768]{0}', space=vmem, size = 0x8000, scoped, tag = 'input window, operand 4, single buffered']
    #allocation14 [shape = 'u8[2048]{0}', space=vmem, size = 0x800, scoped, tag = 'input window, operand 5, single buffered']
    #allocation15 [shape = 's32[1]{0}', space=sflag, size = 0x4, scoped, tag = 'scoped memory for tpu_custom_call.1']
    #allocation16 [shape = 'u8[32768]{0}', space=vmem, size = 0x8000, scoped, tag = 'input window, operand 6, single buffered']
    #allocation17 [shape = 'u8[2048]{0}', space=vmem, size = 0x800, scoped, tag = 'input window, operand 7, single buffered']
    #allocation18 [shape = 's32[1]{0}', space=sflag, size = 0x4, scoped, tag = 'scoped memory for tpu_custom_call.1']
    #allocation19 [shape = 'u8[262144]{0}', space=vmem, size = 0x40000, scoped, tag = 'input window, operand 8, single buffered']
    #allocation20 [shape = 'u8[512]{0}', space=vmem, size = 0x400, scoped, tag = 'input window, operand 9, single buffered']
    #allocation21 [shape = 's32[1]{0}', space=sflag, size = 0x4, scoped, tag = 'scoped memory for tpu_custom_call.1']
    #allocation22 [shape = 'u8[8192]{0}', space=vmem, size = 0x2000, scoped, tag = 'output window, operand 0']
    %15 = vsyncpa [#allocation6], 0
    %s16 = scalar_lea.sflag [#allocation6], 1
    %17 = vsyncpa %s16, 0
    %18 = vsyncpa [#allocation9], 0
    %s19 = scalar_lea.sflag [#allocation9], 1
    %20 = vsyncpa %s19, 0
    %21 = vsyncpa [#allocation12], 0
    %22 = vsyncpa [#allocation15], 0
    %23 = vsyncpa [#allocation18], 0
    %24 = vsyncpa [#allocation21], 0
    %25 = vsyncpa [#allocation7], 0
    %s26 = scalar_lea.sflag [#allocation7], 1
    %27 = vsyncpa %s26, 0
    loop: start=0, step=1, limit=4
    $region2: #{tpu_custom_call.1} parent=1 // loop_pre_header
      _
    $region3: #{tpu_custom_call.1} parent=1 // loop_header
      %s29 = sphi 0, %s33
      %p30 = scmp.ge.s32.totalorder %s29, 4
      %s36 = sphi 0, %s48
      %s37 = sphi 0, %s44
      %s38 = sphi 0, %s36
      %s39 = sphi 0, %s37
      %s40 = sphi 0, %s38
      %s41 = sphi 0, %s39
      %s51 = sphi 0, %s53
      %s54 = sphi 0, %s51
      %s55 = sphi 0, %s54
      %s71 = sphi 0, %s55
      %s79 = sphi 0, %s81
      %s82 = sphi 0, %s79
      %s83 = sphi 0, %s82
      %s99 = sphi 0, %s83
      %s103 = sphi 0, %s103
      %s105 = sphi 0, %s103
      %s106 = sphi 0, %s105
      %s120 = sphi 0, %s106
      %s124 = sphi 0, %s124
      %s126 = sphi 0, %s124
      %s127 = sphi 0, %s126
      %s141 = sphi 0, %s127
      %s145 = sphi 0, %s145
      %s147 = sphi 0, %s145
      %s148 = sphi 0, %s147
      %s162 = sphi 0, %s148
      %s166 = sphi 0, %s166
      %s168 = sphi 0, %s166
      %s169 = sphi 0, %s168
      %s183 = sphi 0, %s169
      %s187 = sphi 0, %s187
      %s189 = sphi 0, %s187
      %s190 = sphi 0, %s189
      %s204 = sphi 0, %s190
      %s208 = sphi 0, %s208
      %s210 = sphi 0, %s208
      %s211 = sphi 0, %s210
      %s225 = sphi 0, %s211
      %s229 = sphi 0, %s229
      %s231 = sphi 0, %s229
      %s232 = sphi 0, %s231
      %s246 = sphi 0, %s232
      %s250 = sphi 0, %s250
      %s252 = sphi 0, %s250
      %s253 = sphi 0, %s252
      %s267 = sphi 0, %s253
      %s275 = sphi 0, %s277
      %s278 = sphi 0, %s275
      %s279 = sphi 0, %s278
      %s295 = sphi 0, %s279
    $region4: #{tpu_custom_call.1} parent=1 // loop_header_branch
      %32 = sbr.rel (%p30) target = $region8
    $region5: #{tpu_custom_call.1} parent=1 // loop_body
      %s34 = ssub.s32 %s29, 1
      %s35 = ssub.s32 %s29, 2
      %s42 = sadd.s32 1, %s37
      %p43 = scmp.ge.s32.totalorder %s42, 1
      %s44 = scalar_select %p43, 0, %s42
      %s45 = sadd.s32 1, %s36
      %s46 = scalar_select %p43, %s45, %s36
      %p47 = scmp.ge.s32.totalorder %s46, 2
      %s48 = scalar_select %p47, 0, %s46
      %s49 = ssub.s32 %s36, %s48
      %p50 = scmp.eq.s32.totalorder %s49, 0
      %s52 = sadd.s32 %s51, 1
      %s53 = scalar_select %p50, %s51, %s52
      %p56 = pneg %p50
      %p57 = scmp.eq.s32.totalorder %s29, 1
      %p58 = por %p56, %p57
      %p59 = scmp.ne.s32.totalorder %s51, %s54
      %p60 = scmp.eq.s32.totalorder %s29, 0
      %p61 = por %p59, %p60
      %p62 = scmp.ne.s32.totalorder %s51, %s54
      %p63 = scmp.eq.s32.totalorder %s34, 1
      %p64 = por %p62, %p63
      %p65 = scmp.ne.s32.totalorder %s54, %s55
      %p66 = scmp.eq.s32.totalorder %s34, 0
      %p67 = por %p65, %p66
      %p68 = scmp.ne.s32.totalorder %s54, %s55
      %p69 = scmp.eq.s32.totalorder %s35, 1
      %p70 = por %p68, %p69
      %p72 = scmp.ne.s32.totalorder %s55, %s71
      %p73 = scmp.eq.s32.totalorder %s35, 0
      %p74 = por %p72, %p73
      %s75 = ssub.s32 %s36, %s48
      %s76 = ssub.s32 %s37, %s44
      %s77 = sor.u32 %s75, %s76
      %p78 = scmp.eq.s32.totalorder %s77, 0
      %s80 = sadd.s32 %s79, 1
      %s81 = scalar_select %p78, %s79, %s80
      %p84 = pneg %p78
      %p85 = scmp.eq.s32.totalorder %s29, 1
      %p86 = por %p84, %p85
      %p87 = scmp.ne.s32.totalorder %s79, %s82
      %p88 = scmp.eq.s32.totalorder %s29, 0
      %p89 = por %p87, %p88
      %p90 = scmp.ne.s32.totalorder %s79, %s82
      %p91 = scmp.eq.s32.totalorder %s34, 1
      %p92 = por %p90, %p91
      %p93 = scmp.ne.s32.totalorder %s82, %s83
      %p94 = scmp.eq.s32.totalorder %s34, 0
      %p95 = por %p93, %p94
      %p96 = scmp.ne.s32.totalorder %s82, %s83
      %p97 = scmp.eq.s32.totalorder %s35, 1
      %p98 = por %p96, %p97
      %p100 = scmp.ne.s32.totalorder %s83, %s99
      %p101 = scmp.eq.s32.totalorder %s35, 0
      %p102 = por %p100, %p101
      %s104 = sadd.s32 %s103, 1
      %p107 = scmp.eq.s32.totalorder %s29, 1
      %p108 = scmp.ne.s32.totalorder %s103, %s105
      %p109 = scmp.eq.s32.totalorder %s29, 0
      %p110 = por %p108, %p109
      %p111 = scmp.ne.s32.totalorder %s103, %s105
      %p112 = scmp.eq.s32.totalorder %s34, 1
      %p113 = por %p111, %p112
      %p114 = scmp.ne.s32.totalorder %s105, %s106
      %p115 = scmp.eq.s32.totalorder %s34, 0
      %p116 = por %p114, %p115
      %p117 = scmp.ne.s32.totalorder %s105, %s106
      %p118 = scmp.eq.s32.totalorder %s35, 1
      %p119 = por %p117, %p118
      %p121 = scmp.ne.s32.totalorder %s106, %s120
      %p122 = scmp.eq.s32.totalorder %s35, 0
      %p123 = por %p121, %p122
      %s125 = sadd.s32 %s124, 1
      %p128 = scmp.eq.s32.totalorder %s29, 1
      %p129 = scmp.ne.s32.totalorder %s124, %s126
      %p130 = scmp.eq.s32.totalorder %s29, 0
      %p131 = por %p129, %p130
      %p132 = scmp.ne.s32.totalorder %s124, %s126
      %p133 = scmp.eq.s32.totalorder %s34, 1
      %p134 = por %p132, %p133
      %p135 = scmp.ne.s32.totalorder %s126, %s127
      %p136 = scmp.eq.s32.totalorder %s34, 0
      %p137 = por %p135, %p136
      %p138 = scmp.ne.s32.totalorder %s126, %s127
      %p139 = scmp.eq.s32.totalorder %s35, 1
      %p140 = por %p138, %p139
      %p142 = scmp.ne.s32.totalorder %s127, %s141
      %p143 = scmp.eq.s32.totalorder %s35, 0
      %p144 = por %p142, %p143
      %s146 = sadd.s32 %s145, 1
      %p149 = scmp.eq.s32.totalorder %s29, 1
      %p150 = scmp.ne.s32.totalorder %s145, %s147
      %p151 = scmp.eq.s32.totalorder %s29, 0
      %p152 = por %p150, %p151
      %p153 = scmp.ne.s32.totalorder %s145, %s147
      %p154 = scmp.eq.s32.totalorder %s34, 1
      %p155 = por %p153, %p154
      %p156 = scmp.ne.s32.totalorder %s147, %s148
      %p157 = scmp.eq.s32.totalorder %s34, 0
      %p158 = por %p156, %p157
      %p159 = scmp.ne.s32.totalorder %s147, %s148
      %p160 = scmp.eq.s32.totalorder %s35, 1
      %p161 = por %p159, %p160
      %p163 = scmp.ne.s32.totalorder %s148, %s162
      %p164 = scmp.eq.s32.totalorder %s35, 0
      %p165 = por %p163, %p164
      %s167 = sadd.s32 %s166, 1
      %p170 = scmp.eq.s32.totalorder %s29, 1
      %p171 = scmp.ne.s32.totalorder %s166, %s168
      %p172 = scmp.eq.s32.totalorder %s29, 0
      %p173 = por %p171, %p172
      %p174 = scmp.ne.s32.totalorder %s166, %s168
      %p175 = scmp.eq.s32.totalorder %s34, 1
      %p176 = por %p174, %p175
      %p177 = scmp.ne.s32.totalorder %s168, %s169
      %p178 = scmp.eq.s32.totalorder %s34, 0
      %p179 = por %p177, %p178
      %p180 = scmp.ne.s32.totalorder %s168, %s169
      %p181 = scmp.eq.s32.totalorder %s35, 1
      %p182 = por %p180, %p181
      %p184 = scmp.ne.s32.totalorder %s169, %s183
      %p185 = scmp.eq.s32.totalorder %s35, 0
      %p186 = por %p184, %p185
      %s188 = sadd.s32 %s187, 1
      %p191 = scmp.eq.s32.totalorder %s29, 1
      %p192 = scmp.ne.s32.totalorder %s187, %s189
      %p193 = scmp.eq.s32.totalorder %s29, 0
      %p194 = por %p192, %p193
      %p195 = scmp.ne.s32.totalorder %s187, %s189
      %p196 = scmp.eq.s32.totalorder %s34, 1
      %p197 = por %p195, %p196
      %p198 = scmp.ne.s32.totalorder %s189, %s190
      %p199 = scmp.eq.s32.totalorder %s34, 0
      %p200 = por %p198, %p199
      %p201 = scmp.ne.s32.totalorder %s189, %s190
      %p202 = scmp.eq.s32.totalorder %s35, 1
      %p203 = por %p201, %p202
      %p205 = scmp.ne.s32.totalorder %s190, %s204
      %p206 = scmp.eq.s32.totalorder %s35, 0
      %p207 = por %p205, %p206
      %s209 = sadd.s32 %s208, 1
      %p212 = scmp.eq.s32.totalorder %s29, 1
      %p213 = scmp.ne.s32.totalorder %s208, %s210
      %p214 = scmp.eq.s32.totalorder %s29, 0
      %p215 = por %p213, %p214
      %p216 = scmp.ne.s32.totalorder %s208, %s210
      %p217 = scmp.eq.s32.totalorder %s34, 1
      %p218 = por %p216, %p217
      %p219 = scmp.ne.s32.totalorder %s210, %s211
      %p220 = scmp.eq.s32.totalorder %s34, 0
      %p221 = por %p219, %p220
      %p222 = scmp.ne.s32.totalorder %s210, %s211
      %p223 = scmp.eq.s32.totalorder %s35, 1
      %p224 = por %p222, %p223
      %p226 = scmp.ne.s32.totalorder %s211, %s225
      %p227 = scmp.eq.s32.totalorder %s35, 0
      %p228 = por %p226, %p227
      %s230 = sadd.s32 %s229, 1
      %p233 = scmp.eq.s32.totalorder %s29, 1
      %p234 = scmp.ne.s32.totalorder %s229, %s231
      %p235 = scmp.eq.s32.totalorder %s29, 0
      %p236 = por %p234, %p235
      %p237 = scmp.ne.s32.totalorder %s229, %s231
      %p238 = scmp.eq.s32.totalorder %s34, 1
      %p239 = por %p237, %p238
      %p240 = scmp.ne.s32.totalorder %s231, %s232
      %p241 = scmp.eq.s32.totalorder %s34, 0
      %p242 = por %p240, %p241
      %p243 = scmp.ne.s32.totalorder %s231, %s232
      %p244 = scmp.eq.s32.totalorder %s35, 1
      %p245 = por %p243, %p244
      %p247 = scmp.ne.s32.totalorder %s232, %s246
      %p248 = scmp.eq.s32.totalorder %s35, 0
      %p249 = por %p247, %p248
      %s251 = sadd.s32 %s250, 1
      %p254 = scmp.eq.s32.totalorder %s29, 1
      %p255 = scmp.ne.s32.totalorder %s250, %s252
      %p256 = scmp.eq.s32.totalorder %s29, 0
      %p257 = por %p255, %p256
      %p258 = scmp.ne.s32.totalorder %s250, %s252
      %p259 = scmp.eq.s32.totalorder %s34, 1
      %p260 = por %p258, %p259
      %p261 = scmp.ne.s32.totalorder %s252, %s253
      %p262 = scmp.eq.s32.totalorder %s34, 0
      %p263 = por %p261, %p262
      %p264 = scmp.ne.s32.totalorder %s252, %s253
      %p265 = scmp.eq.s32.totalorder %s35, 1
      %p266 = por %p264, %p265
      %p268 = scmp.ne.s32.totalorder %s253, %s267
      %p269 = scmp.eq.s32.totalorder %s35, 0
      %p270 = por %p268, %p269
      %s271 = ssub.s32 %s36, %s48
      %s272 = ssub.s32 %s37, %s44
      %s273 = sor.u32 %s271, %s272
      %p274 = scmp.eq.s32.totalorder %s273, 0
      %s276 = sadd.s32 %s275, 1
      %s277 = scalar_select %p274, %s275, %s276
      %p280 = pneg %p274
      %p281 = scmp.eq.s32.totalorder %s29, 1
      %p282 = por %p280, %p281
      %p283 = scmp.ne.s32.totalorder %s275, %s278
      %p284 = scmp.eq.s32.totalorder %s29, 0
      %p285 = por %p283, %p284
      %p286 = scmp.ne.s32.totalorder %s275, %s278
      %p287 = scmp.eq.s32.totalorder %s34, 1
      %p288 = por %p286, %p287
      %p289 = scmp.ne.s32.totalorder %s278, %s279
      %p290 = scmp.eq.s32.totalorder %s34, 0
      %p291 = por %p289, %p290
      %p292 = scmp.ne.s32.totalorder %s278, %s279
      %p293 = scmp.eq.s32.totalorder %s35, 1
      %p294 = por %p292, %p293
      %p296 = scmp.ne.s32.totalorder %s279, %s295
      %p297 = scmp.eq.s32.totalorder %s35, 0
      %p298 = por %p296, %p297
      %p299 = scmp.le.s32.totalorder 1, %s29
      %p300 = scmp.lt.s32.totalorder %s29, 3
      %p301 = pnand %p299, %p300
      %p302 = pneg %p301
      // Predicated region
      $region9: #{tpu_custom_call.1} parent=5 // pred_check
        _
      $region10: #{tpu_custom_call.1} parent=5 // pred_check_branch
        %304 = sbr.rel (%p301) target = $region12
      $region11: #{tpu_custom_call.1} parent=5 // pred_region
        %s305 = ssub.s32 %s29, 1
        // Predicated region
        $region13: #{tpu_custom_call.1} parent=11 // pred_check
          %p306 = pneg %p116
        $region14: #{tpu_custom_call.1} parent=11 // pred_check_branch
          %308 = sbr.rel (%p306) target = $region16
        $region15: #{tpu_custom_call.1} parent=11 // pred_region
          %s310 = ssub.s32 1024, 1024
          %311 = vsyncadd [#allocation9], %s310
          %s312 = sshll.u32 [#allocation10], 4
          %s313 = int_to_ptr.vmem [resolvable:$true] %s312
          %318 = dma.hbm_to_vmem [thread:$0]  %s2, 1024, %s313, [#allocation9], 512, 512, 32
        $region16: #{tpu_custom_call.1} parent=11 // pred_fallthru
          _
        // Predicated region
        $region17: #{tpu_custom_call.1} parent=11 // pred_check
          %p319 = pneg %p137
        $region18: #{tpu_custom_call.1} parent=11 // pred_check_branch
          %321 = sbr.rel (%p319) target = $region20
        $region19: #{tpu_custom_call.1} parent=11 // pred_region
          %s323 = ssub.s32 64, 64
          %324 = vsyncadd [#allocation12], %s323
          %s326 = sshll.u32 [#allocation11], 4
          %s327 = int_to_ptr.vmem [resolvable:$true] %s326
          %329 = dma.hbm_to_vmem [thread:$0]  %s3, 64, %s327, [#allocation12]
        $region20: #{tpu_custom_call.1} parent=11 // pred_fallthru
          _
        // Predicated region
        $region21: #{tpu_custom_call.1} parent=11 // pred_check
          %p330 = pneg %p158
        $region22: #{tpu_custom_call.1} parent=11 // pred_check_branch
          %332 = sbr.rel (%p330) target = $region24
        $region23: #{tpu_custom_call.1} parent=11 // pred_region
          %s334 = ssub.s32 1024, 1024
          %335 = vsyncadd [#allocation12], %s334
          %s336 = sshll.u32 [#allocation13], 4
          %s337 = int_to_ptr.vmem [resolvable:$true] %s336
          %342 = dma.hbm_to_vmem [thread:$0]  %s4, 1024, %s337, [#allocation12], 512, 512, 32
        $region24: #{tpu_custom_call.1} parent=11 // pred_fallthru
          _
        // Predicated region
        $region25: #{tpu_custom_call.1} parent=11 // pred_check
          %p343 = pneg %p179
        $region26: #{tpu_custom_call.1} parent=11 // pred_check_branch
          %345 = sbr.rel (%p343) target = $region28
        $region27: #{tpu_custom_call.1} parent=11 // pred_region
          %s347 = ssub.s32 64, 64
          %348 = vsyncadd [#allocation15], %s347
          %s350 = sshll.u32 [#allocation14], 4
          %s351 = int_to_ptr.vmem [resolvable:$true] %s350
          %353 = dma.hbm_to_vmem [thread:$0]  %s5, 64, %s351, [#allocation15]
        $region28: #{tpu_custom_call.1} parent=11 // pred_fallthru
          _
        // Predicated region
        $region29: #{tpu_custom_call.1} parent=11 // pred_check
          %p354 = pneg %p200
        $region30: #{tpu_custom_call.1} parent=11 // pred_check_branch
          %356 = sbr.rel (%p354) target = $region32
        $region31: #{tpu_custom_call.1} parent=11 // pred_region
          %s358 = ssub.s32 1024, 1024
          %359 = vsyncadd [#allocation15], %s358
          %s360 = sshll.u32 [#allocation16], 4
          %s361 = int_to_ptr.vmem [resolvable:$true] %s360
          %366 = dma.hbm_to_vmem [thread:$0]  %s6, 1024, %s361, [#allocation15], 512, 512, 32
        $region32: #{tpu_custom_call.1} parent=11 // pred_fallthru
          _
        // Predicated region
        $region33: #{tpu_custom_call.1} parent=11 // pred_check
          %p367 = pneg %p221
        $region34: #{tpu_custom_call.1} parent=11 // pred_check_branch
          %369 = sbr.rel (%p367) target = $region36
        $region35: #{tpu_custom_call.1} parent=11 // pred_region
          %s371 = ssub.s32 64, 64
          %372 = vsyncadd [#allocation18], %s371
          %s374 = sshll.u32 [#allocation17], 4
          %s375 = int_to_ptr.vmem [resolvable:$true] %s374
          %377 = dma.hbm_to_vmem [thread:$0]  %s7, 64, %s375, [#allocation18]
        $region36: #{tpu_custom_call.1} parent=11 // pred_fallthru
          _
        // Predicated region
        $region37: #{tpu_custom_call.1} parent=11 // pred_check
          %p378 = pneg %p242
        $region38: #{tpu_custom_call.1} parent=11 // pred_check_branch
          %380 = sbr.rel (%p378) target = $region40
        $region39: #{tpu_custom_call.1} parent=11 // pred_region
          %s382 = ssub.s32 8192, 8192
          %383 = vsyncadd [#allocation18], %s382
          %s384 = sshll.u32 [#allocation19], 4
          %s385 = int_to_ptr.vmem [resolvable:$true] %s384
          %390 = dma.hbm_to_vmem [thread:$0]  %s8, 8192, %s385, [#allocation18], 128, 128, 8
        $region40: #{tpu_custom_call.1} parent=11 // pred_fallthru
          _
        // Predicated region
        $region41: #{tpu_custom_call.1} parent=11 // pred_check
          %p391 = pneg %p263
        $region42: #{tpu_custom_call.1} parent=11 // pred_check_branch
          %393 = sbr.rel (%p391) target = $region44
        $region43: #{tpu_custom_call.1} parent=11 // pred_region
          %s395 = ssub.s32 16, 16
          %396 = vsyncadd [#allocation21], %s395
          %s398 = sshll.u32 [#allocation20], 4
          %s399 = int_to_ptr.vmem [resolvable:$true] %s398
          %401 = dma.hbm_to_vmem [thread:$0]  %s9, 16, %s399, [#allocation21]
        $region44: #{tpu_custom_call.1} parent=11 // pred_fallthru
          _
      $region12: #{tpu_custom_call.1} parent=5 // pred_fallthru
        _
      %p402 = scmp.lt.s32.totalorder %s29, 2
      // Predicated region
      $region45: #{tpu_custom_call.1} parent=5 // pred_check
        %p403 = pneg %p402
      $region46: #{tpu_custom_call.1} parent=5 // pred_check_branch
        %405 = sbr.rel (%p403) target = $region48
      $region47: #{tpu_custom_call.1} parent=5 // pred_region
        // Predicated region
        $region49: #{tpu_custom_call.1} parent=47 // pred_check
          %p406 = pneg %p61
        $region50: #{tpu_custom_call.1} parent=47 // pred_check_branch
          %408 = sbr.rel (%p406) target = $region52
        $region51: #{tpu_custom_call.1} parent=47 // pred_region
          %s409 = sand.u32 %s51, 1
          %s410 = scalar_lea.sflag [#allocation6], %s409
          %s411 = sand.u32 %s51, 1
          %s412 = smul.addr %s411, 8
          %s413 = scalar_lea.vmem [#allocation5], %s412
          %s415 = ssub.s32 128, 128
          %416 = vsyncadd %s410, %s415
          %s417 = smul.addr %s36, 128
          %s418 = scalar_lea.hbm %s0, %s417
          %s420 = sshll.u32 %s413, 4
          %s421 = int_to_ptr.vmem [resolvable:$true] %s420
          %423 = dma.hbm_to_vmem [thread:$0]  %s418, 128, %s421, %s410
        $region52: #{tpu_custom_call.1} parent=47 // pred_fallthru
          _
        // Predicated region
        $region53: #{tpu_custom_call.1} parent=47 // pred_check
          %p424 = pneg %p89
        $region54: #{tpu_custom_call.1} parent=47 // pred_check_branch
          %426 = sbr.rel (%p424) target = $region56
        $region55: #{tpu_custom_call.1} parent=47 // pred_region
          %s427 = sand.u32 %s29, 1
          %s428 = scalar_lea.sflag [#allocation9], %s427
          %s429 = sand.u32 %s79, 1
          %s430 = smul.addr %s429, 8
          %s431 = scalar_lea.vmem [#allocation8], %s430
          %s433 = ssub.s32 128, 128
          %434 = vsyncadd %s428, %s433
          %s435 = sadd.s32 %s37, %s36
          %s436 = smul.addr %s435, 128
          %s437 = scalar_lea.hbm %s1, %s436
          %s439 = sshll.u32 %s431, 4
          %s440 = int_to_ptr.vmem [resolvable:$true] %s439
          %442 = dma.hbm_to_vmem [thread:$0]  %s437, 128, %s440, %s428
        $region56: #{tpu_custom_call.1} parent=47 // pred_fallthru
          _
      $region48: #{tpu_custom_call.1} parent=5 // pred_fallthru
        _
      %p443 = scmp.le.s32.totalorder 1, %s29
      %p444 = scmp.lt.s32.totalorder %s29, 3
      %p445 = pnand %p443, %p444
      %p446 = pneg %p445
      // Predicated region
      $region57: #{tpu_custom_call.1} parent=5 // pred_check
        _
      $region58: #{tpu_custom_call.1} parent=5 // pred_check_branch
        %448 = sbr.rel (%p445) target = $region60
      $region59: #{tpu_custom_call.1} parent=5 // pred_region
        %s449 = ssub.s32 %s29, 1
        %s450 = sand.u32 %s54, 1
        %s451 = scalar_lea.sflag [#allocation6], %s450
        %s452 = sand.u32 %s54, 1
        %s453 = smul.addr %s452, 8
        %s454 = scalar_lea.vmem [#allocation5], %s453
        // Predicated region
        $region61: #{tpu_custom_call.1} parent=59 // pred_check
          %p455 = pneg %p67
        $region62: #{tpu_custom_call.1} parent=59 // pred_check_branch
          %457 = sbr.rel (%p455) target = $region64
        $region63: #{tpu_custom_call.1} parent=59 // pred_region
          %458 = dma.done %s451, 128
        $region64: #{tpu_custom_call.1} parent=59 // pred_fallthru
          _
        %s459 = sand.u32 %s34, 1
        %s460 = scalar_lea.sflag [#allocation9], %s459
        %s461 = sand.u32 %s82, 1
        %s462 = smul.addr %s461, 8
        %s463 = scalar_lea.vmem [#allocation8], %s462
        // Predicated region
        $region65: #{tpu_custom_call.1} parent=59 // pred_check
          %p464 = pneg %p95
        $region66: #{tpu_custom_call.1} parent=59 // pred_check_branch
          %466 = sbr.rel (%p464) target = $region68
        $region67: #{tpu_custom_call.1} parent=59 // pred_region
          %467 = dma.done %s460, 128
        $region68: #{tpu_custom_call.1} parent=59 // pred_fallthru
          _
        // Predicated region
        $region69: #{tpu_custom_call.1} parent=59 // pred_check
          %p468 = pneg %p116
        $region70: #{tpu_custom_call.1} parent=59 // pred_check_branch
          %470 = sbr.rel (%p468) target = $region72
        $region71: #{tpu_custom_call.1} parent=59 // pred_region
          %471 = dma.done [#allocation9], 1024
        $region72: #{tpu_custom_call.1} parent=59 // pred_fallthru
          _
        // Predicated region
        $region73: #{tpu_custom_call.1} parent=59 // pred_check
          %p472 = pneg %p137
        $region74: #{tpu_custom_call.1} parent=59 // pred_check_branch
          %474 = sbr.rel (%p472) target = $region76
        $region75: #{tpu_custom_call.1} parent=59 // pred_region
          %475 = dma.done [#allocation12], 64
        $region76: #{tpu_custom_call.1} parent=59 // pred_fallthru
          _
        // Predicated region
        $region77: #{tpu_custom_call.1} parent=59 // pred_check
          %p476 = pneg %p158
        $region78: #{tpu_custom_call.1} parent=59 // pred_check_branch
          %478 = sbr.rel (%p476) target = $region80
        $region79: #{tpu_custom_call.1} parent=59 // pred_region
          %479 = dma.done [#allocation12], 1024
        $region80: #{tpu_custom_call.1} parent=59 // pred_fallthru
          _
        // Predicated region
        $region81: #{tpu_custom_call.1} parent=59 // pred_check
          %p480 = pneg %p179
        $region82: #{tpu_custom_call.1} parent=59 // pred_check_branch
          %482 = sbr.rel (%p480) target = $region84
        $region83: #{tpu_custom_call.1} parent=59 // pred_region
          %483 = dma.done [#allocation15], 64
        $region84: #{tpu_custom_call.1} parent=59 // pred_fallthru
          _
        // Predicated region
        $region85: #{tpu_custom_call.1} parent=59 // pred_check
          %p484 = pneg %p200
        $region86: #{tpu_custom_call.1} parent=59 // pred_check_branch
          %486 = sbr.rel (%p484) target = $region88
        $region87: #{tpu_custom_call.1} parent=59 // pred_region
          %487 = dma.done [#allocation15], 1024
        $region88: #{tpu_custom_call.1} parent=59 // pred_fallthru
          _
        // Predicated region
        $region89: #{tpu_custom_call.1} parent=59 // pred_check
          %p488 = pneg %p221
        $region90: #{tpu_custom_call.1} parent=59 // pred_check_branch
          %490 = sbr.rel (%p488) target = $region92
        $region91: #{tpu_custom_call.1} parent=59 // pred_region
          %491 = dma.done [#allocation18], 64
        $region92: #{tpu_custom_call.1} parent=59 // pred_fallthru
          _
        // Predicated region
        $region93: #{tpu_custom_call.1} parent=59 // pred_check
          %p492 = pneg %p242
        $region94: #{tpu_custom_call.1} parent=59 // pred_check_branch
          %494 = sbr.rel (%p492) target = $region96
        $region95: #{tpu_custom_call.1} parent=59 // pred_region
          %495 = dma.done [#allocation18], 8192
        $region96: #{tpu_custom_call.1} parent=59 // pred_fallthru
          _
        // Predicated region
        $region97: #{tpu_custom_call.1} parent=59 // pred_check
          %p496 = pneg %p263
        $region98: #{tpu_custom_call.1} parent=59 // pred_check_branch
          %498 = sbr.rel (%p496) target = $region100
        $region99: #{tpu_custom_call.1} parent=59 // pred_region
          %499 = dma.done [#allocation21], 16
        $region100: #{tpu_custom_call.1} parent=59 // pred_fallthru
          _
        %s500 = sand.u32 %s54, 1
        %s501 = scalar_lea.sflag [#allocation6], %s500
        %s502 = sand.u32 %s54, 1
        %s503 = smul.addr %s502, 8
        %s504 = scalar_lea.vmem [#allocation5], %s503
        %p505 = pneg %p67
        %p506 = pneg %p64
        %s507 = sand.u32 %s34, 1
        %s508 = scalar_lea.sflag [#allocation9], %s507
        %s509 = sand.u32 %s82, 1
        %s510 = smul.addr %s509, 8
        %s511 = scalar_lea.vmem [#allocation8], %s510
        %p512 = pneg %p95
        %p513 = pneg %p92
        %p514 = pneg %p116
        %p515 = pneg %p113
        %p516 = pneg %p137
        %p517 = pneg %p134
        %p518 = pneg %p158
        %p519 = pneg %p155
        %p520 = pneg %p179
        %p521 = pneg %p176
        %p522 = pneg %p200
        %p523 = pneg %p197
        %p524 = pneg %p221
        %p525 = pneg %p218
        %p526 = pneg %p242
        %p527 = pneg %p239
        %p528 = pneg %p263
        %p529 = pneg %p260
        %p530 = pneg %p291
        %p531 = pneg %p288
        %s532 = sand.u32 %s278, 1
        %s533 = scalar_lea.sflag [#allocation7], %s532
        %s534 = sand.u32 %s278, 1
        %s535 = smul.addr %s534, 8
        %s536 = scalar_lea.vmem [#allocation22], %s535
        %p537 = scmp.eq.s32.totalorder %s39, 0
        // Predicated region
        $region101: #{tpu_custom_call.1} parent=59 // pred_check
          %p538 = pneg %p537
        $region102: #{tpu_custom_call.1} parent=59 // pred_check_branch
          %540 = sbr.rel (%p538) target = $region104
        $region103: #{tpu_custom_call.1} parent=59 // pred_region
          %v541 = vld [vmem:[%s454] sm:$0xff]
          %v542 = vld [vmem:[#allocation13] sm:$0xff]
          %v543 = vld [vmem:[#allocation13 + $0x8] sm:$0xff]
          %v544 = vld [vmem:[#allocation13 + $0x10] sm:$0xff]
          %v545 = vld [vmem:[#allocation13 + $0x18] sm:$0xff]
          %v546 = vld [vmem:[#allocation13 + $0x20] sm:$0xff]
          %v547 = vld [vmem:[#allocation13 + $0x28] sm:$0xff]
          %v548 = vld [vmem:[#allocation13 + $0x30] sm:$0xff]
          %v549 = vld [vmem:[#allocation13 + $0x38] sm:$0xff]
          %v550 = vld [vmem:[#allocation14] sm:$0xf]
          %v552 = vlaneseq
          %v553 = vshrl.u32 %v552, 7
          %v554 = vsub.s32 0, %v553
          %v555 = vrot.slane %v550, %v554
          %v556 = vlaneseq
          %v557 = vshrl.u32 %v556, 7
          %v558 = vsub.s32 1, %v557
          %v559 = vrot.slane %v550, %v558
          %v560 = vlaneseq
          %v561 = vshrl.u32 %v560, 7
          %v562 = vsub.s32 2, %v561
          %v563 = vrot.slane %v550, %v562
          %v564 = vlaneseq
          %v565 = vshrl.u32 %v564, 7
          %v566 = vsub.s32 3, %v565
          %v567 = vrot.slane %v550, %v566
          %vm572 = vcmask 130048
          %v574 = vsel %vm572, %v541, 0
          %576 = vmatprep.subr.mxu0 %v543
          %577 = vmatpush1.msra.mxu0 %v542
          %578 = vmatprep.subr.mxu0 %v547
          %579 = vmatpush1.msra.mxu0 %v546
          %580 = vmatprep.subr.mxu0 0.0
          %581 = vmatpush1.msra.mxu0 0.0
          %582 = vmatprep.subr.mxu0 0.0
          %583 = vmatpush1.msra.mxu0 0.0
          %584 = vmatprep.subr.mxu0 0.0
          %585 = vmatpush1.msra.mxu0 0.0
          %586 = vmatprep.subr.mxu0 0.0
          %587 = vmatpush1.msra.mxu0 0.0
          %588 = vmatprep.subr.mxu0 0.0
          %589 = vmatpush1.msra.mxu0 0.0
          %590 = vmatprep.subr.mxu0 0.0
          %591 = vmatpush1.msra.mxu0 0.0
          %592 = vmatprep.subr.mxu0 0.0
          %593 = vmatpush1.msra.mxu0 0.0
          %594 = vmatprep.subr.mxu0 0.0
          %595 = vmatpush1.msra.mxu0 0.0
          %596 = vmatprep.subr.mxu0 0.0
          %597 = vmatpush1.msra.mxu0 0.0
          %598 = vmatprep.subr.mxu0 0.0
          %599 = vmatpush1.msra.mxu0 0.0
          %600 = vmatprep.subr.mxu0 0.0
          %601 = vmatpush1.msra.mxu0 0.0
          %602 = vmatprep.subr.mxu0 0.0
          %603 = vmatpush1.msra.mxu0 0.0
          %604 = vmatprep.subr.mxu0 0.0
          %605 = vmatpush1.msra.mxu0 0.0
          %606 = vmatprep.subr.mxu0 0.0
          %607 = vmatpush1.msra.mxu0 0.0
          %608 = vmatprep.subr.mxu0 0.0
          %609 = vmatpush1.msra.mxu0 0.0
          %610 = vmatprep.subr.mxu0 0.0
          %611 = vmatpush1.msra.mxu0 0.0
          %612 = vmatprep.subr.mxu0 0.0
          %613 = vmatpush1.msra.mxu0 0.0
          %614 = vmatprep.subr.mxu0 0.0
          %615 = vmatpush1.msra.mxu0 0.0
          %616 = vmatprep.subr.mxu0 0.0
          %617 = vmatpush1.msra.mxu0 0.0
          %618 = vmatprep.subr.mxu0 0.0
          %619 = vmatpush1.msra.mxu0 0.0
          %620 = vmatprep.subr.mxu0 0.0
          %621 = vmatpush1.msra.mxu0 0.0
          %622 = vmatprep.subr.mxu0 0.0
          %623 = vmatpush1.msra.mxu0 0.0
          %624 = vmatprep.subr.mxu0 0.0
          %625 = vmatpush1.msra.mxu0 0.0
          %626 = vmatprep.subr.mxu0 0.0
          %627 = vmatpush1.msra.mxu0 0.0
          %628 = vmatprep.subr.mxu0 0.0
          %629 = vmatpush1.msra.mxu0 0.0
          %630 = vmatprep.subr.mxu0 0.0
          %631 = vmatpush1.msra.mxu0 0.0
          %632 = vmatprep.subr.mxu0 0.0
          %633 = vmatpush1.msra.mxu0 0.0
          %634 = vmatprep.subr.mxu0 0.0
          %635 = vmatpush1.msra.mxu0 0.0
          %636 = vmatprep.subr.mxu0 0.0
          %637 = vmatpush1.msra.mxu0 0.0
          %638 = vmatprep.subr.mxu0 0.0
          %639 = vmatpush1.msra.mxu0 0.0
          %640 = vmatprep.mubr.f32.mxu0 0.0
          %641 = vmatmul.mubr.f32.gmra.mrb[0].mxu0 %v574
          %v642 = vpop.f32.mrb[0].mxu0
          %v643 = vadd.f32 %v555, %v642
          %v644 = vpop.f32.mrb[0].mxu0
          %v645 = vadd.f32 %v559, %v644
          %646 = vdwg.mxu0
          %647 = vmatprep.subr.mxu0 %v545
          %648 = vmatpush1.msra.mxu0 %v544
          %649 = vmatprep.subr.mxu0 %v549
          %650 = vmatpush1.msra.mxu0 %v548
          %651 = vmatprep.subr.mxu0 0.0
          %652 = vmatpush1.msra.mxu0 0.0
          %653 = vmatprep.subr.mxu0 0.0
          %654 = vmatpush1.msra.mxu0 0.0
          %655 = vmatprep.subr.mxu0 0.0
          %656 = vmatpush1.msra.mxu0 0.0
          %657 = vmatprep.subr.mxu0 0.0
          %658 = vmatpush1.msra.mxu0 0.0
          %659 = vmatprep.subr.mxu0 0.0
          %660 = vmatpush1.msra.mxu0 0.0
          %661 = vmatprep.subr.mxu0 0.0
          %662 = vmatpush1.msra.mxu0 0.0
          %663 = vmatprep.subr.mxu0 0.0
          %664 = vmatpush1.msra.mxu0 0.0
          %665 = vmatprep.subr.mxu0 0.0
          %666 = vmatpush1.msra.mxu0 0.0
          %667 = vmatprep.subr.mxu0 0.0
          %668 = vmatpush1.msra.mxu0 0.0
          %669 = vmatprep.subr.mxu0 0.0
          %670 = vmatpush1.msra.mxu0 0.0
          %671 = vmatprep.subr.mxu0 0.0
          %672 = vmatpush1.msra.mxu0 0.0
          %673 = vmatprep.subr.mxu0 0.0
          %674 = vmatpush1.msra.mxu0 0.0
          %675 = vmatprep.subr.mxu0 0.0
          %676 = vmatpush1.msra.mxu0 0.0
          %677 = vmatprep.subr.mxu0 0.0
          %678 = vmatpush1.msra.mxu0 0.0
          %679 = vmatprep.subr.mxu0 0.0
          %680 = vmatpush1.msra.mxu0 0.0
          %681 = vmatprep.subr.mxu0 0.0
          %682 = vmatpush1.msra.mxu0 0.0
          %683 = vmatprep.subr.mxu0 0.0
          %684 = vmatpush1.msra.mxu0 0.0
          %685 = vmatprep.subr.mxu0 0.0
          %686 = vmatpush1.msra.mxu0 0.0
          %687 = vmatprep.subr.mxu0 0.0
          %688 = vmatpush1.msra.mxu0 0.0
          %689 = vmatprep.subr.mxu0 0.0
          %690 = vmatpush1.msra.mxu0 0.0
          %691 = vmatprep.subr.mxu0 0.0
          %692 = vmatpush1.msra.mxu0 0.0
          %693 = vmatprep.subr.mxu0 0.0
          %694 = vmatpush1.msra.mxu0 0.0
          %695 = vmatprep.subr.mxu0 0.0
          %696 = vmatpush1.msra.mxu0 0.0
          %697 = vmatprep.subr.mxu0 0.0
          %698 = vmatpush1.msra.mxu0 0.0
          %699 = vmatprep.subr.mxu0 0.0
          %700 = vmatpush1.msra.mxu0 0.0
          %701 = vmatprep.subr.mxu0 0.0
          %702 = vmatpush1.msra.mxu0 0.0
          %703 = vmatprep.subr.mxu0 0.0
          %704 = vmatpush1.msra.mxu0 0.0
          %705 = vmatprep.subr.mxu0 0.0
          %706 = vmatpush1.msra.mxu0 0.0
          %707 = vmatprep.subr.mxu0 0.0
          %708 = vmatpush1.msra.mxu0 0.0
          %709 = vmatprep.subr.mxu0 0.0
          %710 = vmatpush1.msra.mxu0 0.0
          %711 = vmatprep.mubr.f32.mxu0 0.0
          %712 = vmatmul.mubr.f32.gmra.mrb[0].mxu0 %v574
          %v713 = vpop.f32.mrb[0].mxu0
          %v714 = vadd.f32 %v563, %v713
          %v715 = vpop.f32.mrb[0].mxu0
          %v716 = vadd.f32 %v567, %v715
          %717 = vdwg.mxu0
          %v718 = vld [vmem:[#allocation16] sm:$0xff]
          %v719 = vld [vmem:[#allocation16 + $0x8] sm:$0xff]
          %v720 = vld [vmem:[#allocation16 + $0x10] sm:$0xff]
          %v721 = vld [vmem:[#allocation16 + $0x18] sm:$0xff]
          %v722 = vld [vmem:[#allocation16 + $0x20] sm:$0xff]
          %v723 = vld [vmem:[#allocation16 + $0x28] sm:$0xff]
          %v724 = vld [vmem:[#allocation16 + $0x30] sm:$0xff]
          %v725 = vld [vmem:[#allocation16 + $0x38] sm:$0xff]
          %v726 = vld [vmem:[#allocation17] sm:$0xf]
          %v728 = vlaneseq
          %v729 = vshrl.u32 %v728, 7
          %v730 = vsub.s32 0, %v729
          %v731 = vrot.slane %v726, %v730
          %v732 = vlaneseq
          %v733 = vshrl.u32 %v732, 7
          %v734 = vsub.s32 1, %v733
          %v735 = vrot.slane %v726, %v734
          %v736 = vlaneseq
          %v737 = vshrl.u32 %v736, 7
          %v738 = vsub.s32 2, %v737
          %v739 = vrot.slane %v726, %v738
          %v740 = vlaneseq
          %v741 = vshrl.u32 %v740, 7
          %v742 = vsub.s32 3, %v741
          %v743 = vrot.slane %v726, %v742
          %748 = vmatprep.subr.mxu0 %v719
          %749 = vmatpush1.msra.mxu0 %v718
          %750 = vmatprep.subr.mxu0 %v723
          %751 = vmatpush1.msra.mxu0 %v722
          %752 = vmatprep.subr.mxu0 0.0
          %753 = vmatpush1.msra.mxu0 0.0
          %754 = vmatprep.subr.mxu0 0.0
          %755 = vmatpush1.msra.mxu0 0.0
          %756 = vmatprep.subr.mxu0 0.0
          %757 = vmatpush1.msra.mxu0 0.0
          %758 = vmatprep.subr.mxu0 0.0
          %759 = vmatpush1.msra.mxu0 0.0
          %760 = vmatprep.subr.mxu0 0.0
          %761 = vmatpush1.msra.mxu0 0.0
          %762 = vmatprep.subr.mxu0 0.0
          %763 = vmatpush1.msra.mxu0 0.0
          %764 = vmatprep.subr.mxu0 0.0
          %765 = vmatpush1.msra.mxu0 0.0
          %766 = vmatprep.subr.mxu0 0.0
          %767 = vmatpush1.msra.mxu0 0.0
          %768 = vmatprep.subr.mxu0 0.0
          %769 = vmatpush1.msra.mxu0 0.0
          %770 = vmatprep.subr.mxu0 0.0
          %771 = vmatpush1.msra.mxu0 0.0
          %772 = vmatprep.subr.mxu0 0.0
          %773 = vmatpush1.msra.mxu0 0.0
          %774 = vmatprep.subr.mxu0 0.0
          %775 = vmatpush1.msra.mxu0 0.0
          %776 = vmatprep.subr.mxu0 0.0
          %777 = vmatpush1.msra.mxu0 0.0
          %778 = vmatprep.subr.mxu0 0.0
          %779 = vmatpush1.msra.mxu0 0.0
          %780 = vmatprep.subr.mxu0 0.0
          %781 = vmatpush1.msra.mxu0 0.0
          %782 = vmatprep.subr.mxu0 0.0
          %783 = vmatpush1.msra.mxu0 0.0
          %784 = vmatprep.subr.mxu0 0.0
          %785 = vmatpush1.msra.mxu0 0.0
          %786 = vmatprep.subr.mxu0 0.0
          %787 = vmatpush1.msra.mxu0 0.0
          %788 = vmatprep.subr.mxu0 0.0
          %789 = vmatpush1.msra.mxu0 0.0
          %790 = vmatprep.subr.mxu0 0.0
          %791 = vmatpush1.msra.mxu0 0.0
          %792 = vmatprep.subr.mxu0 0.0
          %793 = vmatpush1.msra.mxu0 0.0
          %794 = vmatprep.subr.mxu0 0.0
          %795 = vmatpush1.msra.mxu0 0.0
          %796 = vmatprep.subr.mxu0 0.0
          %797 = vmatpush1.msra.mxu0 0.0
          %798 = vmatprep.subr.mxu0 0.0
          %799 = vmatpush1.msra.mxu0 0.0
          %800 = vmatprep.subr.mxu0 0.0
          %801 = vmatpush1.msra.mxu0 0.0
          %802 = vmatprep.subr.mxu0 0.0
          %803 = vmatpush1.msra.mxu0 0.0
          %804 = vmatprep.subr.mxu0 0.0
          %805 = vmatpush1.msra.mxu0 0.0
          %806 = vmatprep.subr.mxu0 0.0
          %807 = vmatpush1.msra.mxu0 0.0
          %808 = vmatprep.subr.mxu0 0.0
          %809 = vmatpush1.msra.mxu0 0.0
          %810 = vmatprep.subr.mxu0 0.0
          %811 = vmatpush1.msra.mxu0 0.0
          %812 = vmatprep.mubr.f32.mxu0 0.0
          %813 = vmatmul.mubr.f32.gmra.mrb[0].mxu0 %v574
          %v814 = vpop.f32.mrb[0].mxu0
          %v815 = vadd.f32 %v731, %v814
          %v816 = vpop.f32.mrb[0].mxu0
          %v817 = vadd.f32 %v735, %v816
          %818 = vdwg.mxu0
          %819 = vmatprep.subr.mxu0 %v721
          %820 = vmatpush1.msra.mxu0 %v720
          %821 = vmatprep.subr.mxu0 %v725
          %822 = vmatpush1.msra.mxu0 %v724
          %823 = vmatprep.subr.mxu0 0.0
          %824 = vmatpush1.msra.mxu0 0.0
          %825 = vmatprep.subr.mxu0 0.0
          %826 = vmatpush1.msra.mxu0 0.0
          %827 = vmatprep.subr.mxu0 0.0
          %828 = vmatpush1.msra.mxu0 0.0
          %829 = vmatprep.subr.mxu0 0.0
          %830 = vmatpush1.msra.mxu0 0.0
          %831 = vmatprep.subr.mxu0 0.0
          %832 = vmatpush1.msra.mxu0 0.0
          %833 = vmatprep.subr.mxu0 0.0
          %834 = vmatpush1.msra.mxu0 0.0
          %835 = vmatprep.subr.mxu0 0.0
          %836 = vmatpush1.msra.mxu0 0.0
          %837 = vmatprep.subr.mxu0 0.0
          %838 = vmatpush1.msra.mxu0 0.0
          %839 = vmatprep.subr.mxu0 0.0
          %840 = vmatpush1.msra.mxu0 0.0
          %841 = vmatprep.subr.mxu0 0.0
          %842 = vmatpush1.msra.mxu0 0.0
          %843 = vmatprep.subr.mxu0 0.0
          %844 = vmatpush1.msra.mxu0 0.0
          %845 = vmatprep.subr.mxu0 0.0
          %846 = vmatpush1.msra.mxu0 0.0
          %847 = vmatprep.subr.mxu0 0.0
          %848 = vmatpush1.msra.mxu0 0.0
          %849 = vmatprep.subr.mxu0 0.0
          %850 = vmatpush1.msra.mxu0 0.0
          %851 = vmatprep.subr.mxu0 0.0
          %852 = vmatpush1.msra.mxu0 0.0
          %853 = vmatprep.subr.mxu0 0.0
          %854 = vmatpush1.msra.mxu0 0.0
          %855 = vmatprep.subr.mxu0 0.0
          %856 = vmatpush1.msra.mxu0 0.0
          %857 = vmatprep.subr.mxu0 0.0
          %858 = vmatpush1.msra.mxu0 0.0
          %859 = vmatprep.subr.mxu0 0.0
          %860 = vmatpush1.msra.mxu0 0.0
          %861 = vmatprep.subr.mxu0 0.0
          %862 = vmatpush1.msra.mxu0 0.0
          %863 = vmatprep.subr.mxu0 0.0
          %864 = vmatpush1.msra.mxu0 0.0
          %865 = vmatprep.subr.mxu0 0.0
          %866 = vmatpush1.msra.mxu0 0.0
          %867 = vmatprep.subr.mxu0 0.0
          %868 = vmatpush1.msra.mxu0 0.0
          %869 = vmatprep.subr.mxu0 0.0
          %870 = vmatpush1.msra.mxu0 0.0
          %871 = vmatprep.subr.mxu0 0.0
          %872 = vmatpush1.msra.mxu0 0.0
          %873 = vmatprep.subr.mxu0 0.0
          %874 = vmatpush1.msra.mxu0 0.0
          %875 = vmatprep.subr.mxu0 0.0
          %876 = vmatpush1.msra.mxu0 0.0
          %877 = vmatprep.subr.mxu0 0.0
          %878 = vmatpush1.msra.mxu0 0.0
          %879 = vmatprep.subr.mxu0 0.0
          %880 = vmatpush1.msra.mxu0 0.0
          %881 = vmatprep.subr.mxu0 0.0
          %882 = vmatpush1.msra.mxu0 0.0
          %883 = vmatprep.mubr.f32.mxu0 0.0
          %884 = vmatmul.mubr.f32.gmra.mrb[0].mxu0 %v574
          %v885 = vpop.f32.mrb[0].mxu0
          %v886 = vadd.f32 %v739, %v885
          %v887 = vpop.f32.mrb[0].mxu0
          %v888 = vadd.f32 %v743, %v887
          %889 = vdwg.mxu0
          %890 = vst [vmem:[#allocation2] sm:$0xff] %v643
          %891 = vst [vmem:[#allocation2 + $0x8] sm:$0xff] %v645
          %892 = vst [vmem:[#allocation2 + $0x10] sm:$0xff] %v714
          %893 = vst [vmem:[#allocation2 + $0x18] sm:$0xff] %v716
          %894 = vst [vmem:[#allocation3] sm:$0xff] %v815
          %895 = vst [vmem:[#allocation3 + $0x8] sm:$0xff] %v817
          %896 = vst [vmem:[#allocation3 + $0x10] sm:$0xff] %v886
          %897 = vst [vmem:[#allocation3 + $0x18] sm:$0xff] %v888
        $region104: #{tpu_custom_call.1} parent=59 // pred_fallthru
          _
        %v898 = vld [vmem:[%s463] sm:$0xff]
        %v899 = vld [vmem:[#allocation10] sm:$0xff]
        %v900 = vld [vmem:[#allocation10 + $0x8] sm:$0xff]
        %v901 = vld [vmem:[#allocation10 + $0x10] sm:$0xff]
        %v902 = vld [vmem:[#allocation10 + $0x18] sm:$0xff]
        %v903 = vld [vmem:[#allocation10 + $0x20] sm:$0xff]
        %v904 = vld [vmem:[#allocation10 + $0x28] sm:$0xff]
        %v905 = vld [vmem:[#allocation10 + $0x30] sm:$0xff]
        %v906 = vld [vmem:[#allocation10 + $0x38] sm:$0xff]
        %v907 = vld [vmem:[#allocation11] sm:$0xf]
        %v909 = vlaneseq
        %v910 = vshrl.u32 %v909, 7
        %v911 = vsub.s32 0, %v910
        %v912 = vrot.slane %v907, %v911
        %v913 = vlaneseq
        %v914 = vshrl.u32 %v913, 7
        %v915 = vsub.s32 1, %v914
        %v916 = vrot.slane %v907, %v915
        %v917 = vlaneseq
        %v918 = vshrl.u32 %v917, 7
        %v919 = vsub.s32 2, %v918
        %v920 = vrot.slane %v907, %v919
        %v921 = vlaneseq
        %v922 = vshrl.u32 %v921, 7
        %v923 = vsub.s32 3, %v922
        %v924 = vrot.slane %v907, %v923
        %vm929 = vcmask 130048
        %v931 = vsel %vm929, %v898, 0
        %933 = vmatprep.subr.mxu0 %v900
        %934 = vmatpush1.msra.mxu0 %v899
        %935 = vmatprep.subr.mxu0 %v904
        %936 = vmatpush1.msra.mxu0 %v903
        %937 = vmatprep.subr.mxu0 0.0
        %938 = vmatpush1.msra.mxu0 0.0
        %939 = vmatprep.subr.mxu0 0.0
        %940 = vmatpush1.msra.mxu0 0.0
        %941 = vmatprep.subr.mxu0 0.0
        %942 = vmatpush1.msra.mxu0 0.0
        %943 = vmatprep.subr.mxu0 0.0
        %944 = vmatpush1.msra.mxu0 0.0
        %945 = vmatprep.subr.mxu0 0.0
        %946 = vmatpush1.msra.mxu0 0.0
        %947 = vmatprep.subr.mxu0 0.0
        %948 = vmatpush1.msra.mxu0 0.0
        %949 = vmatprep.subr.mxu0 0.0
        %950 = vmatpush1.msra.mxu0 0.0
        %951 = vmatprep.subr.mxu0 0.0
        %952 = vmatpush1.msra.mxu0 0.0
        %953 = vmatprep.subr.mxu0 0.0
        %954 = vmatpush1.msra.mxu0 0.0
        %955 = vmatprep.subr.mxu0 0.0
        %956 = vmatpush1.msra.mxu0 0.0
        %957 = vmatprep.subr.mxu0 0.0
        %958 = vmatpush1.msra.mxu0 0.0
        %959 = vmatprep.subr.mxu0 0.0
        %960 = vmatpush1.msra.mxu0 0.0
        %961 = vmatprep.subr.mxu0 0.0
        %962 = vmatpush1.msra.mxu0 0.0
        %963 = vmatprep.subr.mxu0 0.0
        %964 = vmatpush1.msra.mxu0 0.0
        %965 = vmatprep.subr.mxu0 0.0
        %966 = vmatpush1.msra.mxu0 0.0
        %967 = vmatprep.subr.mxu0 0.0
        %968 = vmatpush1.msra.mxu0 0.0
        %969 = vmatprep.subr.mxu0 0.0
        %970 = vmatpush1.msra.mxu0 0.0
        %971 = vmatprep.subr.mxu0 0.0
        %972 = vmatpush1.msra.mxu0 0.0
        %973 = vmatprep.subr.mxu0 0.0
        %974 = vmatpush1.msra.mxu0 0.0
        %975 = vmatprep.subr.mxu0 0.0
        %976 = vmatpush1.msra.mxu0 0.0
        %977 = vmatprep.subr.mxu0 0.0
        %978 = vmatpush1.msra.mxu0 0.0
        %979 = vmatprep.subr.mxu0 0.0
        %980 = vmatpush1.msra.mxu0 0.0
        %981 = vmatprep.subr.mxu0 0.0
        %982 = vmatpush1.msra.mxu0 0.0
        %983 = vmatprep.subr.mxu0 0.0
        %984 = vmatpush1.msra.mxu0 0.0
        %985 = vmatprep.subr.mxu0 0.0
        %986 = vmatpush1.msra.mxu0 0.0
        %987 = vmatprep.subr.mxu0 0.0
        %988 = vmatpush1.msra.mxu0 0.0
        %989 = vmatprep.subr.mxu0 0.0
        %990 = vmatpush1.msra.mxu0 0.0
        %991 = vmatprep.subr.mxu0 0.0
        %992 = vmatpush1.msra.mxu0 0.0
        %993 = vmatprep.subr.mxu0 0.0
        %994 = vmatpush1.msra.mxu0 0.0
        %995 = vmatprep.subr.mxu0 0.0
        %996 = vmatpush1.msra.mxu0 0.0
        %997 = vmatprep.mubr.f32.mxu0 0.0
        %998 = vmatmul.mubr.f32.gmra.mrb[0].mxu0 %v931
        %v999 = vpop.f32.mrb[0].mxu0
        %v1000 = vadd.f32 %v912, %v999
        %v1001 = vpop.f32.mrb[0].mxu0
        %v1002 = vadd.f32 %v916, %v1001
        %1003 = vdwg.mxu0
        %1004 = vmatprep.subr.mxu0 %v902
        %1005 = vmatpush1.msra.mxu0 %v901
        %1006 = vmatprep.subr.mxu0 %v906
        %1007 = vmatpush1.msra.mxu0 %v905
        %1008 = vmatprep.subr.mxu0 0.0
        %1009 = vmatpush1.msra.mxu0 0.0
        %1010 = vmatprep.subr.mxu0 0.0
        %1011 = vmatpush1.msra.mxu0 0.0
        %1012 = vmatprep.subr.mxu0 0.0
        %1013 = vmatpush1.msra.mxu0 0.0
        %1014 = vmatprep.subr.mxu0 0.0
        %1015 = vmatpush1.msra.mxu0 0.0
        %1016 = vmatprep.subr.mxu0 0.0
        %1017 = vmatpush1.msra.mxu0 0.0
        %1018 = vmatprep.subr.mxu0 0.0
        %1019 = vmatpush1.msra.mxu0 0.0
        %1020 = vmatprep.subr.mxu0 0.0
        %1021 = vmatpush1.msra.mxu0 0.0
        %1022 = vmatprep.subr.mxu0 0.0
        %1023 = vmatpush1.msra.mxu0 0.0
        %1024 = vmatprep.subr.mxu0 0.0
        %1025 = vmatpush1.msra.mxu0 0.0
        %1026 = vmatprep.subr.mxu0 0.0
        %1027 = vmatpush1.msra.mxu0 0.0
        %1028 = vmatprep.subr.mxu0 0.0
        %1029 = vmatpush1.msra.mxu0 0.0
        %1030 = vmatprep.subr.mxu0 0.0
        %1031 = vmatpush1.msra.mxu0 0.0
        %1032 = vmatprep.subr.mxu0 0.0
        %1033 = vmatpush1.msra.mxu0 0.0
        %1034 = vmatprep.subr.mxu0 0.0
        %1035 = vmatpush1.msra.mxu0 0.0
        %1036 = vmatprep.subr.mxu0 0.0
        %1037 = vmatpush1.msra.mxu0 0.0
        %1038 = vmatprep.subr.mxu0 0.0
        %1039 = vmatpush1.msra.mxu0 0.0
        %1040 = vmatprep.subr.mxu0 0.0
        %1041 = vmatpush1.msra.mxu0 0.0
        %1042 = vmatprep.subr.mxu0 0.0
        %1043 = vmatpush1.msra.mxu0 0.0
        %1044 = vmatprep.subr.mxu0 0.0
        %1045 = vmatpush1.msra.mxu0 0.0
        %1046 = vmatprep.subr.mxu0 0.0
        %1047 = vmatpush1.msra.mxu0 0.0
        %1048 = vmatprep.subr.mxu0 0.0
        %1049 = vmatpush1.msra.mxu0 0.0
        %1050 = vmatprep.subr.mxu0 0.0
        %1051 = vmatpush1.msra.mxu0 0.0
        %1052 = vmatprep.subr.mxu0 0.0
        %1053 = vmatpush1.msra.mxu0 0.0
        %1054 = vmatprep.subr.mxu0 0.0
        %1055 = vmatpush1.msra.mxu0 0.0
        %1056 = vmatprep.subr.mxu0 0.0
        %1057 = vmatpush1.msra.mxu0 0.0
        %1058 = vmatprep.subr.mxu0 0.0
        %1059 = vmatpush1.msra.mxu0 0.0
        %1060 = vmatprep.subr.mxu0 0.0
        %1061 = vmatpush1.msra.mxu0 0.0
        %1062 = vmatprep.subr.mxu0 0.0
        %1063 = vmatpush1.msra.mxu0 0.0
        %1064 = vmatprep.subr.mxu0 0.0
        %1065 = vmatpush1.msra.mxu0 0.0
        %1066 = vmatprep.subr.mxu0 0.0
        %1067 = vmatpush1.msra.mxu0 0.0
        %1068 = vmatprep.mubr.f32.mxu0 0.0
        %1069 = vmatmul.mubr.f32.gmra.mrb[0].mxu0 %v931
        %v1070 = vpop.f32.mrb[0].mxu0
        %v1071 = vadd.f32 %v920, %v1070
        %v1072 = vpop.f32.mrb[0].mxu0
        %v1073 = vadd.f32 %v924, %v1072
        %1074 = vdwg.mxu0
        %v1075 = vld [vmem:[#allocation2] sm:$0xff]
        %v1076 = vld [vmem:[#allocation3] sm:$0xff]
        %1077 = vmatprep.subr.mxu0 0.0
        %1078 = vmatpush1.xpose.msra.mxu0 %v1075
        %1079 = vmatprep.subr.mxu0 0.0
        %1080 = vmatpush1.xpose.msra.mxu0 0.0
        %1081 = vmatprep.subr.mxu0 0.0
        %1082 = vmatpush1.xpose.msra.mxu0 0.0
        %1083 = vmatprep.subr.mxu0 0.0
        %1084 = vmatpush1.xpose.msra.mxu0 0.0
        %1085 = vmatprep.subr.mxu0 0.0
        %1086 = vmatpush1.xpose.msra.mxu0 0.0
        %1087 = vmatprep.subr.mxu0 0.0
        %1088 = vmatpush1.xpose.msra.mxu0 0.0
        %1089 = vmatprep.subr.mxu0 0.0
        %1090 = vmatpush1.xpose.msra.mxu0 0.0
        %1091 = vmatprep.subr.mxu0 0.0
        %1092 = vmatpush1.xpose.msra.mxu0 0.0
        %1093 = vmatprep.subr.mxu0 0.0
        %1094 = vmatpush1.xpose.msra.mxu0 0.0
        %1095 = vmatprep.subr.mxu0 0.0
        %1096 = vmatpush1.xpose.msra.mxu0 0.0
        %1097 = vmatprep.subr.mxu0 0.0
        %1098 = vmatpush1.xpose.msra.mxu0 0.0
        %1099 = vmatprep.subr.mxu0 0.0
        %1100 = vmatpush1.xpose.msra.mxu0 0.0
        %1101 = vmatprep.subr.mxu0 0.0
        %1102 = vmatpush1.xpose.msra.mxu0 0.0
        %1103 = vmatprep.subr.mxu0 0.0
        %1104 = vmatpush1.xpose.msra.mxu0 0.0
        %1105 = vmatprep.subr.mxu0 0.0
        %1106 = vmatpush1.xpose.msra.mxu0 0.0
        %1107 = vmatprep.subr.mxu0 0.0
        %1108 = vmatpush1.xpose.msra.mxu0 0.0
        %1109 = vmatprep.subr.mxu0 0.0
        %1110 = vmatpush1.xpose.msra.mxu0 0.0
        %1111 = vmatprep.subr.mxu0 0.0
        %1112 = vmatpush1.xpose.msra.mxu0 0.0
        %1113 = vmatprep.subr.mxu0 0.0
        %1114 = vmatpush1.xpose.msra.mxu0 0.0
        %1115 = vmatprep.subr.mxu0 0.0
        %1116 = vmatpush1.xpose.msra.mxu0 0.0
        %1117 = vmatprep.subr.mxu0 0.0
        %1118 = vmatpush1.xpose.msra.mxu0 0.0
        %1119 = vmatprep.subr.mxu0 0.0
        %1120 = vmatpush1.xpose.msra.mxu0 0.0
        %1121 = vmatprep.subr.mxu0 0.0
        %1122 = vmatpush1.xpose.msra.mxu0 0.0
        %1123 = vmatprep.subr.mxu0 0.0
        %1124 = vmatpush1.xpose.msra.mxu0 0.0
        %1125 = vmatprep.subr.mxu0 0.0
        %1126 = vmatpush1.xpose.msra.mxu0 0.0
        %1127 = vmatprep.subr.mxu0 0.0
        %1128 = vmatpush1.xpose.msra.mxu0 0.0
        %1129 = vmatprep.subr.mxu0 0.0
        %1130 = vmatpush1.xpose.msra.mxu0 0.0
        %1131 = vmatprep.subr.mxu0 0.0
        %1132 = vmatpush1.xpose.msra.mxu0 0.0
        %1133 = vmatprep.subr.mxu0 0.0
        %1134 = vmatpush1.xpose.msra.mxu0 0.0
        %1135 = vmatprep.subr.mxu0 0.0
        %1136 = vmatpush1.xpose.msra.mxu0 0.0
        %1137 = vmatprep.subr.mxu0 0.0
        %1138 = vmatpush1.xpose.msra.mxu0 0.0
        %1139 = vmatprep.subr.mxu0 0.0
        %1140 = vmatpush1.xpose.msra.mxu0 0.0
        %1141 = vmatprep.mubr.f32.mxu0 0.0
        %1142 = vmatmul.mubr.f32.gmra.mrb[0].mxu0 %v1000
        %v1143 = vpop.f32.mrb[0].mxu0
        %v1144 = vadd.f32 0.0, %v1143
        %v1145 = vpop.f32.mrb[0].mxu0
        %1146 = vdwg.mxu0
        %vm1147 = vcmask 64512
        %v1148 = vsel %vm1147, %v1144, -inf
        %1149 = vmax.xlane.f32.xlu0 %v1148
        %v1150 = vpop.xlane.xlu0 %1149
        %v1151 = vsub.f32 %v1144, %v1150
        %v1152 = vmul.f32 %v1151, 1.442695
        %v1153 = vpow.pop %v1152
        %v1154 = vsel %vm1147, %v1153, 0.0
        %1155 = vadd.xlane.f32.xlu0 %v1154
        %v1156 = vpop.xlane.xlu0 %1155
        %v1157 = vrcp.pop %v1156
        %v1158 = vmul.f32 %v1153, %v1157
        %v1160 = vsel %vm1147, %v1158, 0
        %1162 = vmatprep.subr.mxu0 0.0
        %1163 = vmatpush1.msra.mxu0 %v1076
        %1164 = vmatprep.subr.mxu0 0.0
        %1165 = vmatpush1.msra.mxu0 0.0
        %1166 = vmatprep.subr.mxu0 0.0
        %1167 = vmatpush1.msra.mxu0 0.0
        %1168 = vmatprep.subr.mxu0 0.0
        %1169 = vmatpush1.msra.mxu0 0.0
        %1170 = vmatprep.subr.mxu0 0.0
        %1171 = vmatpush1.msra.mxu0 0.0
        %1172 = vmatprep.subr.mxu0 0.0
        %1173 = vmatpush1.msra.mxu0 0.0
        %1174 = vmatprep.subr.mxu0 0.0
        %1175 = vmatpush1.msra.mxu0 0.0
        %1176 = vmatprep.subr.mxu0 0.0
        %1177 = vmatpush1.msra.mxu0 0.0
        %1178 = vmatprep.subr.mxu0 0.0
        %1179 = vmatpush1.msra.mxu0 0.0
        %1180 = vmatprep.subr.mxu0 0.0
        %1181 = vmatpush1.msra.mxu0 0.0
        %1182 = vmatprep.subr.mxu0 0.0
        %1183 = vmatpush1.msra.mxu0 0.0
        %1184 = vmatprep.subr.mxu0 0.0
        %1185 = vmatpush1.msra.mxu0 0.0
        %1186 = vmatprep.subr.mxu0 0.0
        %1187 = vmatpush1.msra.mxu0 0.0
        %1188 = vmatprep.subr.mxu0 0.0
        %1189 = vmatpush1.msra.mxu0 0.0
        %1190 = vmatprep.subr.mxu0 0.0
        %1191 = vmatpush1.msra.mxu0 0.0
        %1192 = vmatprep.subr.mxu0 0.0
        %1193 = vmatpush1.msra.mxu0 0.0
        %1194 = vmatprep.subr.mxu0 0.0
        %1195 = vmatpush1.msra.mxu0 0.0
        %1196 = vmatprep.subr.mxu0 0.0
        %1197 = vmatpush1.msra.mxu0 0.0
        %1198 = vmatprep.subr.mxu0 0.0
        %1199 = vmatpush1.msra.mxu0 0.0
        %1200 = vmatprep.subr.mxu0 0.0
        %1201 = vmatpush1.msra.mxu0 0.0
        %1202 = vmatprep.subr.mxu0 0.0
        %1203 = vmatpush1.msra.mxu0 0.0
        %1204 = vmatprep.subr.mxu0 0.0
        %1205 = vmatpush1.msra.mxu0 0.0
        %1206 = vmatprep.subr.mxu0 0.0
        %1207 = vmatpush1.msra.mxu0 0.0
        %1208 = vmatprep.subr.mxu0 0.0
        %1209 = vmatpush1.msra.mxu0 0.0
        %1210 = vmatprep.subr.mxu0 0.0
        %1211 = vmatpush1.msra.mxu0 0.0
        %1212 = vmatprep.subr.mxu0 0.0
        %1213 = vmatpush1.msra.mxu0 0.0
        %1214 = vmatprep.subr.mxu0 0.0
        %1215 = vmatpush1.msra.mxu0 0.0
        %1216 = vmatprep.subr.mxu0 0.0
        %1217 = vmatpush1.msra.mxu0 0.0
        %1218 = vmatprep.subr.mxu0 0.0
        %1219 = vmatpush1.msra.mxu0 0.0
        %1220 = vmatprep.subr.mxu0 0.0
        %1221 = vmatpush1.msra.mxu0 0.0
        %1222 = vmatprep.subr.mxu0 0.0
        %1223 = vmatpush1.msra.mxu0 0.0
        %1224 = vmatprep.subr.mxu0 0.0
        %1225 = vmatpush1.msra.mxu0 0.0
        %1226 = vmatprep.mubr.f32.mxu0 0.0
        %1227 = vmatmul.mubr.f32.gmra.mrb[0].mxu0 %v1160
        %v1228 = vpop.f32.mrb[0].mxu0
        %v1229 = vadd.f32 0.0, %v1228
        %v1230 = vpop.f32.mrb[0].mxu0
        %1231 = vdwg.mxu0
        %1232 = vst [vmem:[#allocation4] sm:$0xff] %v1229
        %v1233 = vld [vmem:[#allocation2 + $0x8] sm:$0xff]
        %v1234 = vld [vmem:[#allocation3 + $0x8] sm:$0xff]
        %1235 = vmatprep.subr.mxu0 0.0
        %1236 = vmatpush1.xpose.msra.mxu0 %v1233
        %1237 = vmatprep.subr.mxu0 0.0
        %1238 = vmatpush1.xpose.msra.mxu0 0.0
        %1239 = vmatprep.subr.mxu0 0.0
        %1240 = vmatpush1.xpose.msra.mxu0 0.0
        %1241 = vmatprep.subr.mxu0 0.0
        %1242 = vmatpush1.xpose.msra.mxu0 0.0
        %1243 = vmatprep.subr.mxu0 0.0
        %1244 = vmatpush1.xpose.msra.mxu0 0.0
        %1245 = vmatprep.subr.mxu0 0.0
        %1246 = vmatpush1.xpose.msra.mxu0 0.0
        %1247 = vmatprep.subr.mxu0 0.0
        %1248 = vmatpush1.xpose.msra.mxu0 0.0
        %1249 = vmatprep.subr.mxu0 0.0
        %1250 = vmatpush1.xpose.msra.mxu0 0.0
        %1251 = vmatprep.subr.mxu0 0.0
        %1252 = vmatpush1.xpose.msra.mxu0 0.0
        %1253 = vmatprep.subr.mxu0 0.0
        %1254 = vmatpush1.xpose.msra.mxu0 0.0
        %1255 = vmatprep.subr.mxu0 0.0
        %1256 = vmatpush1.xpose.msra.mxu0 0.0
        %1257 = vmatprep.subr.mxu0 0.0
        %1258 = vmatpush1.xpose.msra.mxu0 0.0
        %1259 = vmatprep.subr.mxu0 0.0
        %1260 = vmatpush1.xpose.msra.mxu0 0.0
        %1261 = vmatprep.subr.mxu0 0.0
        %1262 = vmatpush1.xpose.msra.mxu0 0.0
        %1263 = vmatprep.subr.mxu0 0.0
        %1264 = vmatpush1.xpose.msra.mxu0 0.0
        %1265 = vmatprep.subr.mxu0 0.0
        %1266 = vmatpush1.xpose.msra.mxu0 0.0
        %1267 = vmatprep.subr.mxu0 0.0
        %1268 = vmatpush1.xpose.msra.mxu0 0.0
        %1269 = vmatprep.subr.mxu0 0.0
        %1270 = vmatpush1.xpose.msra.mxu0 0.0
        %1271 = vmatprep.subr.mxu0 0.0
        %1272 = vmatpush1.xpose.msra.mxu0 0.0
        %1273 = vmatprep.subr.mxu0 0.0
        %1274 = vmatpush1.xpose.msra.mxu0 0.0
        %1275 = vmatprep.subr.mxu0 0.0
        %1276 = vmatpush1.xpose.msra.mxu0 0.0
        %1277 = vmatprep.subr.mxu0 0.0
        %1278 = vmatpush1.xpose.msra.mxu0 0.0
        %1279 = vmatprep.subr.mxu0 0.0
        %1280 = vmatpush1.xpose.msra.mxu0 0.0
        %1281 = vmatprep.subr.mxu0 0.0
        %1282 = vmatpush1.xpose.msra.mxu0 0.0
        %1283 = vmatprep.subr.mxu0 0.0
        %1284 = vmatpush1.xpose.msra.mxu0 0.0
        %1285 = vmatprep.subr.mxu0 0.0
        %1286 = vmatpush1.xpose.msra.mxu0 0.0
        %1287 = vmatprep.subr.mxu0 0.0
        %1288 = vmatpush1.xpose.msra.mxu0 0.0
        %1289 = vmatprep.subr.mxu0 0.0
        %1290 = vmatpush1.xpose.msra.mxu0 0.0
        %1291 = vmatprep.subr.mxu0 0.0
        %1292 = vmatpush1.xpose.msra.mxu0 0.0
        %1293 = vmatprep.subr.mxu0 0.0
        %1294 = vmatpush1.xpose.msra.mxu0 0.0
        %1295 = vmatprep.subr.mxu0 0.0
        %1296 = vmatpush1.xpose.msra.mxu0 0.0
        %1297 = vmatprep.subr.mxu0 0.0
        %1298 = vmatpush1.xpose.msra.mxu0 0.0
        %1299 = vmatprep.mubr.f32.mxu0 0.0
        %1300 = vmatmul.mubr.f32.gmra.mrb[0].mxu0 %v1002
        %v1301 = vpop.f32.mrb[0].mxu0
        %v1302 = vadd.f32 0.0, %v1301
        %v1303 = vpop.f32.mrb[0].mxu0
        %1304 = vdwg.mxu0
        %v1305 = vsel %vm1147, %v1302, -inf
        %1306 = vmax.xlane.f32.xlu0 %v1305
        %v1307 = vpop.xlane.xlu0 %1306
        %v1308 = vsub.f32 %v1302, %v1307
        %v1309 = vmul.f32 %v1308, 1.442695
        %v1310 = vpow.pop %v1309
        %v1311 = vsel %vm1147, %v1310, 0.0
        %1312 = vadd.xlane.f32.xlu0 %v1311
        %v1313 = vpop.xlane.xlu0 %1312
        %v1314 = vrcp.pop %v1313
        %v1315 = vmul.f32 %v1310, %v1314
        %v1317 = vsel %vm1147, %v1315, 0
        %1319 = vmatprep.subr.mxu0 0.0
        %1320 = vmatpush1.msra.mxu0 %v1234
        %1321 = vmatprep.subr.mxu0 0.0
        %1322 = vmatpush1.msra.mxu0 0.0
        %1323 = vmatprep.subr.mxu0 0.0
        %1324 = vmatpush1.msra.mxu0 0.0
        %1325 = vmatprep.subr.mxu0 0.0
        %1326 = vmatpush1.msra.mxu0 0.0
        %1327 = vmatprep.subr.mxu0 0.0
        %1328 = vmatpush1.msra.mxu0 0.0
        %1329 = vmatprep.subr.mxu0 0.0
        %1330 = vmatpush1.msra.mxu0 0.0
        %1331 = vmatprep.subr.mxu0 0.0
        %1332 = vmatpush1.msra.mxu0 0.0
        %1333 = vmatprep.subr.mxu0 0.0
        %1334 = vmatpush1.msra.mxu0 0.0
        %1335 = vmatprep.subr.mxu0 0.0
        %1336 = vmatpush1.msra.mxu0 0.0
        %1337 = vmatprep.subr.mxu0 0.0
        %1338 = vmatpush1.msra.mxu0 0.0
        %1339 = vmatprep.subr.mxu0 0.0
        %1340 = vmatpush1.msra.mxu0 0.0
        %1341 = vmatprep.subr.mxu0 0.0
        %1342 = vmatpush1.msra.mxu0 0.0
        %1343 = vmatprep.subr.mxu0 0.0
        %1344 = vmatpush1.msra.mxu0 0.0
        %1345 = vmatprep.subr.mxu0 0.0
        %1346 = vmatpush1.msra.mxu0 0.0
        %1347 = vmatprep.subr.mxu0 0.0
        %1348 = vmatpush1.msra.mxu0 0.0
        %1349 = vmatprep.subr.mxu0 0.0
        %1350 = vmatpush1.msra.mxu0 0.0
        %1351 = vmatprep.subr.mxu0 0.0
        %1352 = vmatpush1.msra.mxu0 0.0
        %1353 = vmatprep.subr.mxu0 0.0
        %1354 = vmatpush1.msra.mxu0 0.0
        %1355 = vmatprep.subr.mxu0 0.0
        %1356 = vmatpush1.msra.mxu0 0.0
        %1357 = vmatprep.subr.mxu0 0.0
        %1358 = vmatpush1.msra.mxu0 0.0
        %1359 = vmatprep.subr.mxu0 0.0
        %1360 = vmatpush1.msra.mxu0 0.0
        %1361 = vmatprep.subr.mxu0 0.0
        %1362 = vmatpush1.msra.mxu0 0.0
        %1363 = vmatprep.subr.mxu0 0.0
        %1364 = vmatpush1.msra.mxu0 0.0
        %1365 = vmatprep.subr.mxu0 0.0
        %1366 = vmatpush1.msra.mxu0 0.0
        %1367 = vmatprep.subr.mxu0 0.0
        %1368 = vmatpush1.msra.mxu0 0.0
        %1369 = vmatprep.subr.mxu0 0.0
        %1370 = vmatpush1.msra.mxu0 0.0
        %1371 = vmatprep.subr.mxu0 0.0
        %1372 = vmatpush1.msra.mxu0 0.0
        %1373 = vmatprep.subr.mxu0 0.0
        %1374 = vmatpush1.msra.mxu0 0.0
        %1375 = vmatprep.subr.mxu0 0.0
        %1376 = vmatpush1.msra.mxu0 0.0
        %1377 = vmatprep.subr.mxu0 0.0
        %1378 = vmatpush1.msra.mxu0 0.0
        %1379 = vmatprep.subr.mxu0 0.0
        %1380 = vmatpush1.msra.mxu0 0.0
        %1381 = vmatprep.subr.mxu0 0.0
        %1382 = vmatpush1.msra.mxu0 0.0
        %1383 = vmatprep.mubr.f32.mxu0 0.0
        %1384 = vmatmul.mubr.f32.gmra.mrb[0].mxu0 %v1317
        %v1385 = vpop.f32.mrb[0].mxu0
        %v1386 = vadd.f32 0.0, %v1385
        %v1387 = vpop.f32.mrb[0].mxu0
        %1388 = vdwg.mxu0
        %1389 = vst [vmem:[#allocation4 + $0x8] sm:$0xff] %v1386
        %v1390 = vld [vmem:[#allocation2 + $0x10] sm:$0xff]
        %v1391 = vld [vmem:[#allocation3 + $0x10] sm:$0xff]
        %1392 = vmatprep.subr.mxu0 0.0
        %1393 = vmatpush1.xpose.msra.mxu0 %v1390
        %1394 = vmatprep.subr.mxu0 0.0
        %1395 = vmatpush1.xpose.msra.mxu0 0.0
        %1396 = vmatprep.subr.mxu0 0.0
        %1397 = vmatpush1.xpose.msra.mxu0 0.0
        %1398 = vmatprep.subr.mxu0 0.0
        %1399 = vmatpush1.xpose.msra.mxu0 0.0
        %1400 = vmatprep.subr.mxu0 0.0
        %1401 = vmatpush1.xpose.msra.mxu0 0.0
        %1402 = vmatprep.subr.mxu0 0.0
        %1403 = vmatpush1.xpose.msra.mxu0 0.0
        %1404 = vmatprep.subr.mxu0 0.0
        %1405 = vmatpush1.xpose.msra.mxu0 0.0
        %1406 = vmatprep.subr.mxu0 0.0
        %1407 = vmatpush1.xpose.msra.mxu0 0.0
        %1408 = vmatprep.subr.mxu0 0.0
        %1409 = vmatpush1.xpose.msra.mxu0 0.0
        %1410 = vmatprep.subr.mxu0 0.0
        %1411 = vmatpush1.xpose.msra.mxu0 0.0
        %1412 = vmatprep.subr.mxu0 0.0
        %1413 = vmatpush1.xpose.msra.mxu0 0.0
        %1414 = vmatprep.subr.mxu0 0.0
        %1415 = vmatpush1.xpose.msra.mxu0 0.0
        %1416 = vmatprep.subr.mxu0 0.0
        %1417 = vmatpush1.xpose.msra.mxu0 0.0
        %1418 = vmatprep.subr.mxu0 0.0
        %1419 = vmatpush1.xpose.msra.mxu0 0.0
        %1420 = vmatprep.subr.mxu0 0.0
        %1421 = vmatpush1.xpose.msra.mxu0 0.0
        %1422 = vmatprep.subr.mxu0 0.0
        %1423 = vmatpush1.xpose.msra.mxu0 0.0
        %1424 = vmatprep.subr.mxu0 0.0
        %1425 = vmatpush1.xpose.msra.mxu0 0.0
        %1426 = vmatprep.subr.mxu0 0.0
        %1427 = vmatpush1.xpose.msra.mxu0 0.0
        %1428 = vmatprep.subr.mxu0 0.0
        %1429 = vmatpush1.xpose.msra.mxu0 0.0
        %1430 = vmatprep.subr.mxu0 0.0
        %1431 = vmatpush1.xpose.msra.mxu0 0.0
        %1432 = vmatprep.subr.mxu0 0.0
        %1433 = vmatpush1.xpose.msra.mxu0 0.0
        %1434 = vmatprep.subr.mxu0 0.0
        %1435 = vmatpush1.xpose.msra.mxu0 0.0
        %1436 = vmatprep.subr.mxu0 0.0
        %1437 = vmatpush1.xpose.msra.mxu0 0.0
        %1438 = vmatprep.subr.mxu0 0.0
        %1439 = vmatpush1.xpose.msra.mxu0 0.0
        %1440 = vmatprep.subr.mxu0 0.0
        %1441 = vmatpush1.xpose.msra.mxu0 0.0
        %1442 = vmatprep.subr.mxu0 0.0
        %1443 = vmatpush1.xpose.msra.mxu0 0.0
        %1444 = vmatprep.subr.mxu0 0.0
        %1445 = vmatpush1.xpose.msra.mxu0 0.0
        %1446 = vmatprep.subr.mxu0 0.0
        %1447 = vmatpush1.xpose.msra.mxu0 0.0
        %1448 = vmatprep.subr.mxu0 0.0
        %1449 = vmatpush1.xpose.msra.mxu0 0.0
        %1450 = vmatprep.subr.mxu0 0.0
        %1451 = vmatpush1.xpose.msra.mxu0 0.0
        %1452 = vmatprep.subr.mxu0 0.0
        %1453 = vmatpush1.xpose.msra.mxu0 0.0
        %1454 = vmatprep.subr.mxu0 0.0
        %1455 = vmatpush1.xpose.msra.mxu0 0.0
        %1456 = vmatprep.mubr.f32.mxu0 0.0
        %1457 = vmatmul.mubr.f32.gmra.mrb[0].mxu0 %v1071
        %v1458 = vpop.f32.mrb[0].mxu0
        %v1459 = vadd.f32 0.0, %v1458
        %v1460 = vpop.f32.mrb[0].mxu0
        %1461 = vdwg.mxu0
        %v1462 = vsel %vm1147, %v1459, -inf
        %1463 = vmax.xlane.f32.xlu0 %v1462
        %v1464 = vpop.xlane.xlu0 %1463
        %v1465 = vsub.f32 %v1459, %v1464
        %v1466 = vmul.f32 %v1465, 1.442695
        %v1467 = vpow.pop %v1466
        %v1468 = vsel %vm1147, %v1467, 0.0
        %1469 = vadd.xlane.f32.xlu0 %v1468
        %v1470 = vpop.xlane.xlu0 %1469
        %v1471 = vrcp.pop %v1470
        %v1472 = vmul.f32 %v1467, %v1471
        %v1474 = vsel %vm1147, %v1472, 0
        %1476 = vmatprep.subr.mxu0 0.0
        %1477 = vmatpush1.msra.mxu0 %v1391
        %1478 = vmatprep.subr.mxu0 0.0
        %1479 = vmatpush1.msra.mxu0 0.0
        %1480 = vmatprep.subr.mxu0 0.0
        %1481 = vmatpush1.msra.mxu0 0.0
        %1482 = vmatprep.subr.mxu0 0.0
        %1483 = vmatpush1.msra.mxu0 0.0
        %1484 = vmatprep.subr.mxu0 0.0
        %1485 = vmatpush1.msra.mxu0 0.0
        %1486 = vmatprep.subr.mxu0 0.0
        %1487 = vmatpush1.msra.mxu0 0.0
        %1488 = vmatprep.subr.mxu0 0.0
        %1489 = vmatpush1.msra.mxu0 0.0
        %1490 = vmatprep.subr.mxu0 0.0
        %1491 = vmatpush1.msra.mxu0 0.0
        %1492 = vmatprep.subr.mxu0 0.0
        %1493 = vmatpush1.msra.mxu0 0.0
        %1494 = vmatprep.subr.mxu0 0.0
        %1495 = vmatpush1.msra.mxu0 0.0
        %1496 = vmatprep.subr.mxu0 0.0
        %1497 = vmatpush1.msra.mxu0 0.0
        %1498 = vmatprep.subr.mxu0 0.0
        %1499 = vmatpush1.msra.mxu0 0.0
        %1500 = vmatprep.subr.mxu0 0.0
        %1501 = vmatpush1.msra.mxu0 0.0
        %1502 = vmatprep.subr.mxu0 0.0
        %1503 = vmatpush1.msra.mxu0 0.0
        %1504 = vmatprep.subr.mxu0 0.0
        %1505 = vmatpush1.msra.mxu0 0.0
        %1506 = vmatprep.subr.mxu0 0.0
        %1507 = vmatpush1.msra.mxu0 0.0
        %1508 = vmatprep.subr.mxu0 0.0
        %1509 = vmatpush1.msra.mxu0 0.0
        %1510 = vmatprep.subr.mxu0 0.0
        %1511 = vmatpush1.msra.mxu0 0.0
        %1512 = vmatprep.subr.mxu0 0.0
        %1513 = vmatpush1.msra.mxu0 0.0
        %1514 = vmatprep.subr.mxu0 0.0
        %1515 = vmatpush1.msra.mxu0 0.0
        %1516 = vmatprep.subr.mxu0 0.0
        %1517 = vmatpush1.msra.mxu0 0.0
        %1518 = vmatprep.subr.mxu0 0.0
        %1519 = vmatpush1.msra.mxu0 0.0
        %1520 = vmatprep.subr.mxu0 0.0
        %1521 = vmatpush1.msra.mxu0 0.0
        %1522 = vmatprep.subr.mxu0 0.0
        %1523 = vmatpush1.msra.mxu0 0.0
        %1524 = vmatprep.subr.mxu0 0.0
        %1525 = vmatpush1.msra.mxu0 0.0
        %1526 = vmatprep.subr.mxu0 0.0
        %1527 = vmatpush1.msra.mxu0 0.0
        %1528 = vmatprep.subr.mxu0 0.0
        %1529 = vmatpush1.msra.mxu0 0.0
        %1530 = vmatprep.subr.mxu0 0.0
        %1531 = vmatpush1.msra.mxu0 0.0
        %1532 = vmatprep.subr.mxu0 0.0
        %1533 = vmatpush1.msra.mxu0 0.0
        %1534 = vmatprep.subr.mxu0 0.0
        %1535 = vmatpush1.msra.mxu0 0.0
        %1536 = vmatprep.subr.mxu0 0.0
        %1537 = vmatpush1.msra.mxu0 0.0
        %1538 = vmatprep.subr.mxu0 0.0
        %1539 = vmatpush1.msra.mxu0 0.0
        %1540 = vmatprep.mubr.f32.mxu0 0.0
        %1541 = vmatmul.mubr.f32.gmra.mrb[0].mxu0 %v1474
        %v1542 = vpop.f32.mrb[0].mxu0
        %v1543 = vadd.f32 0.0, %v1542
        %v1544 = vpop.f32.mrb[0].mxu0
        %1545 = vdwg.mxu0
        %1546 = vst [vmem:[#allocation4 + $0x10] sm:$0xff] %v1543
        %v1547 = vld [vmem:[#allocation2 + $0x18] sm:$0xff]
        %v1548 = vld [vmem:[#allocation3 + $0x18] sm:$0xff]
        %1549 = vmatprep.subr.mxu0 0.0
        %1550 = vmatpush1.xpose.msra.mxu0 %v1547
        %1551 = vmatprep.subr.mxu0 0.0
        %1552 = vmatpush1.xpose.msra.mxu0 0.0
        %1553 = vmatprep.subr.mxu0 0.0
        %1554 = vmatpush1.xpose.msra.mxu0 0.0
        %1555 = vmatprep.subr.mxu0 0.0
        %1556 = vmatpush1.xpose.msra.mxu0 0.0
        %1557 = vmatprep.subr.mxu0 0.0
        %1558 = vmatpush1.xpose.msra.mxu0 0.0
        %1559 = vmatprep.subr.mxu0 0.0
        %1560 = vmatpush1.xpose.msra.mxu0 0.0
        %1561 = vmatprep.subr.mxu0 0.0
        %1562 = vmatpush1.xpose.msra.mxu0 0.0
        %1563 = vmatprep.subr.mxu0 0.0
        %1564 = vmatpush1.xpose.msra.mxu0 0.0
        %1565 = vmatprep.subr.mxu0 0.0
        %1566 = vmatpush1.xpose.msra.mxu0 0.0
        %1567 = vmatprep.subr.mxu0 0.0
        %1568 = vmatpush1.xpose.msra.mxu0 0.0
        %1569 = vmatprep.subr.mxu0 0.0
        %1570 = vmatpush1.xpose.msra.mxu0 0.0
        %1571 = vmatprep.subr.mxu0 0.0
        %1572 = vmatpush1.xpose.msra.mxu0 0.0
        %1573 = vmatprep.subr.mxu0 0.0
        %1574 = vmatpush1.xpose.msra.mxu0 0.0
        %1575 = vmatprep.subr.mxu0 0.0
        %1576 = vmatpush1.xpose.msra.mxu0 0.0
        %1577 = vmatprep.subr.mxu0 0.0
        %1578 = vmatpush1.xpose.msra.mxu0 0.0
        %1579 = vmatprep.subr.mxu0 0.0
        %1580 = vmatpush1.xpose.msra.mxu0 0.0
        %1581 = vmatprep.subr.mxu0 0.0
        %1582 = vmatpush1.xpose.msra.mxu0 0.0
        %1583 = vmatprep.subr.mxu0 0.0
        %1584 = vmatpush1.xpose.msra.mxu0 0.0
        %1585 = vmatprep.subr.mxu0 0.0
        %1586 = vmatpush1.xpose.msra.mxu0 0.0
        %1587 = vmatprep.subr.mxu0 0.0
        %1588 = vmatpush1.xpose.msra.mxu0 0.0
        %1589 = vmatprep.subr.mxu0 0.0
        %1590 = vmatpush1.xpose.msra.mxu0 0.0
        %1591 = vmatprep.subr.mxu0 0.0
        %1592 = vmatpush1.xpose.msra.mxu0 0.0
        %1593 = vmatprep.subr.mxu0 0.0
        %1594 = vmatpush1.xpose.msra.mxu0 0.0
        %1595 = vmatprep.subr.mxu0 0.0
        %1596 = vmatpush1.xpose.msra.mxu0 0.0
        %1597 = vmatprep.subr.mxu0 0.0
        %1598 = vmatpush1.xpose.msra.mxu0 0.0
        %1599 = vmatprep.subr.mxu0 0.0
        %1600 = vmatpush1.xpose.msra.mxu0 0.0
        %1601 = vmatprep.subr.mxu0 0.0
        %1602 = vmatpush1.xpose.msra.mxu0 0.0
        %1603 = vmatprep.subr.mxu0 0.0
        %1604 = vmatpush1.xpose.msra.mxu0 0.0
        %1605 = vmatprep.subr.mxu0 0.0
        %1606 = vmatpush1.xpose.msra.mxu0 0.0
        %1607 = vmatprep.subr.mxu0 0.0
        %1608 = vmatpush1.xpose.msra.mxu0 0.0
        %1609 = vmatprep.subr.mxu0 0.0
        %1610 = vmatpush1.xpose.msra.mxu0 0.0
        %1611 = vmatprep.subr.mxu0 0.0
        %1612 = vmatpush1.xpose.msra.mxu0 0.0
        %1613 = vmatprep.mubr.f32.mxu0 0.0
        %1614 = vmatmul.mubr.f32.gmra.mrb[0].mxu0 %v1073
        %v1615 = vpop.f32.mrb[0].mxu0
        %v1616 = vadd.f32 0.0, %v1615
        %v1617 = vpop.f32.mrb[0].mxu0
        %1618 = vdwg.mxu0
        %v1619 = vsel %vm1147, %v1616, -inf
        %1620 = vmax.xlane.f32.xlu0 %v1619
        %v1621 = vpop.xlane.xlu0 %1620
        %v1622 = vsub.f32 %v1616, %v1621
        %v1623 = vmul.f32 %v1622, 1.442695
        %v1624 = vpow.pop %v1623
        %v1625 = vsel %vm1147, %v1624, 0.0
        %1626 = vadd.xlane.f32.xlu0 %v1625
        %v1627 = vpop.xlane.xlu0 %1626
        %v1628 = vrcp.pop %v1627
        %v1629 = vmul.f32 %v1624, %v1628
        %v1631 = vsel %vm1147, %v1629, 0
        %1633 = vmatprep.subr.mxu0 0.0
        %1634 = vmatpush1.msra.mxu0 %v1548
        %1635 = vmatprep.subr.mxu0 0.0
        %1636 = vmatpush1.msra.mxu0 0.0
        %1637 = vmatprep.subr.mxu0 0.0
        %1638 = vmatpush1.msra.mxu0 0.0
        %1639 = vmatprep.subr.mxu0 0.0
        %1640 = vmatpush1.msra.mxu0 0.0
        %1641 = vmatprep.subr.mxu0 0.0
        %1642 = vmatpush1.msra.mxu0 0.0
        %1643 = vmatprep.subr.mxu0 0.0
        %1644 = vmatpush1.msra.mxu0 0.0
        %1645 = vmatprep.subr.mxu0 0.0
        %1646 = vmatpush1.msra.mxu0 0.0
        %1647 = vmatprep.subr.mxu0 0.0
        %1648 = vmatpush1.msra.mxu0 0.0
        %1649 = vmatprep.subr.mxu0 0.0
        %1650 = vmatpush1.msra.mxu0 0.0
        %1651 = vmatprep.subr.mxu0 0.0
        %1652 = vmatpush1.msra.mxu0 0.0
        %1653 = vmatprep.subr.mxu0 0.0
        %1654 = vmatpush1.msra.mxu0 0.0
        %1655 = vmatprep.subr.mxu0 0.0
        %1656 = vmatpush1.msra.mxu0 0.0
        %1657 = vmatprep.subr.mxu0 0.0
        %1658 = vmatpush1.msra.mxu0 0.0
        %1659 = vmatprep.subr.mxu0 0.0
        %1660 = vmatpush1.msra.mxu0 0.0
        %1661 = vmatprep.subr.mxu0 0.0
        %1662 = vmatpush1.msra.mxu0 0.0
        %1663 = vmatprep.subr.mxu0 0.0
        %1664 = vmatpush1.msra.mxu0 0.0
        %1665 = vmatprep.subr.mxu0 0.0
        %1666 = vmatpush1.msra.mxu0 0.0
        %1667 = vmatprep.subr.mxu0 0.0
        %1668 = vmatpush1.msra.mxu0 0.0
        %1669 = vmatprep.subr.mxu0 0.0
        %1670 = vmatpush1.msra.mxu0 0.0
        %1671 = vmatprep.subr.mxu0 0.0
        %1672 = vmatpush1.msra.mxu0 0.0
        %1673 = vmatprep.subr.mxu0 0.0
        %1674 = vmatpush1.msra.mxu0 0.0
        %1675 = vmatprep.subr.mxu0 0.0
        %1676 = vmatpush1.msra.mxu0 0.0
        %1677 = vmatprep.subr.mxu0 0.0
        %1678 = vmatpush1.msra.mxu0 0.0
        %1679 = vmatprep.subr.mxu0 0.0
        %1680 = vmatpush1.msra.mxu0 0.0
        %1681 = vmatprep.subr.mxu0 0.0
        %1682 = vmatpush1.msra.mxu0 0.0
        %1683 = vmatprep.subr.mxu0 0.0
        %1684 = vmatpush1.msra.mxu0 0.0
        %1685 = vmatprep.subr.mxu0 0.0
        %1686 = vmatpush1.msra.mxu0 0.0
        %1687 = vmatprep.subr.mxu0 0.0
        %1688 = vmatpush1.msra.mxu0 0.0
        %1689 = vmatprep.subr.mxu0 0.0
        %1690 = vmatpush1.msra.mxu0 0.0
        %1691 = vmatprep.subr.mxu0 0.0
        %1692 = vmatpush1.msra.mxu0 0.0
        %1693 = vmatprep.subr.mxu0 0.0
        %1694 = vmatpush1.msra.mxu0 0.0
        %1695 = vmatprep.subr.mxu0 0.0
        %1696 = vmatpush1.msra.mxu0 0.0
        %1697 = vmatprep.mubr.f32.mxu0 0.0
        %1698 = vmatmul.mubr.f32.gmra.mrb[0].mxu0 %v1631
        %v1699 = vpop.f32.mrb[0].mxu0
        %v1700 = vadd.f32 0.0, %v1699
        %v1701 = vpop.f32.mrb[0].mxu0
        %1702 = vdwg.mxu0
        %1703 = vst [vmem:[#allocation4 + $0x18] sm:$0xff] %v1700
        %v1704 = vld [vmem:[#allocation4] sm:$0xff]
        %v1705 = vld [vmem:[#allocation4 + $0x8] sm:$0xff]
        %v1706 = vld [vmem:[#allocation4 + $0x10] sm:$0xff]
        %v1707 = vld [vmem:[#allocation4 + $0x18] sm:$0xff]
        %v1708 = vld [vmem:[#allocation19] sm:$0xff]
        %v1709 = vld [vmem:[#allocation19 + $0x8] sm:$0xff]
        %v1710 = vld [vmem:[#allocation19 + $0x10] sm:$0xff]
        %v1711 = vld [vmem:[#allocation19 + $0x18] sm:$0xff]
        %v1712 = vld [vmem:[#allocation19 + $0x20] sm:$0xff]
        %v1713 = vld [vmem:[#allocation19 + $0x28] sm:$0xff]
        %v1714 = vld [vmem:[#allocation19 + $0x30] sm:$0xff]
        %v1715 = vld [vmem:[#allocation19 + $0x38] sm:$0xff]
        %v1716 = vld [vmem:[#allocation19 + $0x40] sm:$0xff]
        %v1717 = vld [vmem:[#allocation19 + $0x48] sm:$0xff]
        %v1718 = vld [vmem:[#allocation19 + $0x50] sm:$0xff]
        %v1719 = vld [vmem:[#allocation19 + $0x58] sm:$0xff]
        %v1720 = vld [vmem:[#allocation19 + $0x60] sm:$0xff]
        %v1721 = vld [vmem:[#allocation19 + $0x68] sm:$0xff]
        %v1722 = vld [vmem:[#allocation19 + $0x70] sm:$0xff]
        %v1723 = vld [vmem:[#allocation19 + $0x78] sm:$0xff]
        %v1724 = vld [vmem:[#allocation19 + $0x80] sm:$0xff]
        %v1725 = vld [vmem:[#allocation19 + $0x88] sm:$0xff]
        %v1726 = vld [vmem:[#allocation19 + $0x90] sm:$0xff]
        %v1727 = vld [vmem:[#allocation19 + $0x98] sm:$0xff]
        %v1728 = vld [vmem:[#allocation19 + $0xa0] sm:$0xff]
        %v1729 = vld [vmem:[#allocation19 + $0xa8] sm:$0xff]
        %v1730 = vld [vmem:[#allocation19 + $0xb0] sm:$0xff]
        %v1731 = vld [vmem:[#allocation19 + $0xb8] sm:$0xff]
        %v1732 = vld [vmem:[#allocation19 + $0xc0] sm:$0xff]
        %v1733 = vld [vmem:[#allocation19 + $0xc8] sm:$0xff]
        %v1734 = vld [vmem:[#allocation19 + $0xd0] sm:$0xff]
        %v1735 = vld [vmem:[#allocation19 + $0xd8] sm:$0xff]
        %v1736 = vld [vmem:[#allocation19 + $0xe0] sm:$0xff]
        %v1737 = vld [vmem:[#allocation19 + $0xe8] sm:$0xff]
        %v1738 = vld [vmem:[#allocation19 + $0xf0] sm:$0xff]
        %v1739 = vld [vmem:[#allocation19 + $0xf8] sm:$0xff]
        %v1740 = vld [vmem:[#allocation19 + $0x100] sm:$0xff]
        %v1741 = vld [vmem:[#allocation19 + $0x108] sm:$0xff]
        %v1742 = vld [vmem:[#allocation19 + $0x110] sm:$0xff]
        %v1743 = vld [vmem:[#allocation19 + $0x118] sm:$0xff]
        %v1744 = vld [vmem:[#allocation19 + $0x120] sm:$0xff]
        %v1745 = vld [vmem:[#allocation19 + $0x128] sm:$0xff]
        %v1746 = vld [vmem:[#allocation19 + $0x130] sm:$0xff]
        %v1747 = vld [vmem:[#allocation19 + $0x138] sm:$0xff]
        %v1748 = vld [vmem:[#allocation19 + $0x140] sm:$0xff]
        %v1749 = vld [vmem:[#allocation19 + $0x148] sm:$0xff]
        %v1750 = vld [vmem:[#allocation19 + $0x150] sm:$0xff]
        %v1751 = vld [vmem:[#allocation19 + $0x158] sm:$0xff]
        %v1752 = vld [vmem:[#allocation19 + $0x160] sm:$0xff]
        %v1753 = vld [vmem:[#allocation19 + $0x168] sm:$0xff]
        %v1754 = vld [vmem:[#allocation19 + $0x170] sm:$0xff]
        %v1755 = vld [vmem:[#allocation19 + $0x178] sm:$0xff]
        %v1756 = vld [vmem:[#allocation19 + $0x180] sm:$0xff]
        %v1757 = vld [vmem:[#allocation19 + $0x188] sm:$0xff]
        %v1758 = vld [vmem:[#allocation19 + $0x190] sm:$0xff]
        %v1759 = vld [vmem:[#allocation19 + $0x198] sm:$0xff]
        %v1760 = vld [vmem:[#allocation19 + $0x1a0] sm:$0xff]
        %v1761 = vld [vmem:[#allocation19 + $0x1a8] sm:$0xff]
        %v1762 = vld [vmem:[#allocation19 + $0x1b0] sm:$0xff]
        %v1763 = vld [vmem:[#allocation19 + $0x1b8] sm:$0xff]
        %v1764 = vld [vmem:[#allocation19 + $0x1c0] sm:$0xff]
        %v1765 = vld [vmem:[#allocation19 + $0x1c8] sm:$0xff]
        %v1766 = vld [vmem:[#allocation19 + $0x1d0] sm:$0xff]
        %v1767 = vld [vmem:[#allocation19 + $0x1d8] sm:$0xff]
        %v1768 = vld [vmem:[#allocation19 + $0x1e0] sm:$0xff]
        %v1769 = vld [vmem:[#allocation19 + $0x1e8] sm:$0xff]
        %v1770 = vld [vmem:[#allocation19 + $0x1f0] sm:$0xff]
        %v1771 = vld [vmem:[#allocation19 + $0x1f8] sm:$0xff]
        %v1772 = vld [vmem:[#allocation20] sm:$0x1]
        %v1774 = vlaneseq
        %v1775 = vshrl.u32 %v1774, 7
        %v1776 = vsub.s32 0, %v1775
        %v1777 = vrot.slane %v1772, %v1776
        %1779 = vmatprep.subr.mxu0 0.0
        %1780 = vmatpush1.msra.mxu0 %v1708
        %1781 = vmatprep.subr.mxu0 0.0
        %1782 = vmatpush1.msra.mxu0 %v1709
        %1783 = vmatprep.subr.mxu0 0.0
        %1784 = vmatpush1.msra.mxu0 %v1710
        %1785 = vmatprep.subr.mxu0 0.0
        %1786 = vmatpush1.msra.mxu0 %v1711
        %1787 = vmatprep.subr.mxu0 0.0
        %1788 = vmatpush1.msra.mxu0 %v1712
        %1789 = vmatprep.subr.mxu0 0.0
        %1790 = vmatpush1.msra.mxu0 %v1713
        %1791 = vmatprep.subr.mxu0 0.0
        %1792 = vmatpush1.msra.mxu0 %v1714
        %1793 = vmatprep.subr.mxu0 0.0
        %1794 = vmatpush1.msra.mxu0 %v1715
        %1795 = vmatprep.subr.mxu0 0.0
        %1796 = vmatpush1.msra.mxu0 %v1716
        %1797 = vmatprep.subr.mxu0 0.0
        %1798 = vmatpush1.msra.mxu0 %v1717
        %1799 = vmatprep.subr.mxu0 0.0
        %1800 = vmatpush1.msra.mxu0 %v1718
        %1801 = vmatprep.subr.mxu0 0.0
        %1802 = vmatpush1.msra.mxu0 %v1719
        %1803 = vmatprep.subr.mxu0 0.0
        %1804 = vmatpush1.msra.mxu0 %v1720
        %1805 = vmatprep.subr.mxu0 0.0
        %1806 = vmatpush1.msra.mxu0 %v1721
        %1807 = vmatprep.subr.mxu0 0.0
        %1808 = vmatpush1.msra.mxu0 %v1722
        %1809 = vmatprep.subr.mxu0 0.0
        %1810 = vmatpush1.msra.mxu0 %v1723
        %1811 = vmatprep.subr.mxu0 0.0
        %1812 = vmatpush1.msra.mxu0 %v1724
        %1813 = vmatprep.subr.mxu0 0.0
        %1814 = vmatpush1.msra.mxu0 %v1725
        %1815 = vmatprep.subr.mxu0 0.0
        %1816 = vmatpush1.msra.mxu0 %v1726
        %1817 = vmatprep.subr.mxu0 0.0
        %1818 = vmatpush1.msra.mxu0 %v1727
        %1819 = vmatprep.subr.mxu0 0.0
        %1820 = vmatpush1.msra.mxu0 %v1728
        %1821 = vmatprep.subr.mxu0 0.0
        %1822 = vmatpush1.msra.mxu0 %v1729
        %1823 = vmatprep.subr.mxu0 0.0
        %1824 = vmatpush1.msra.mxu0 %v1730
        %1825 = vmatprep.subr.mxu0 0.0
        %1826 = vmatpush1.msra.mxu0 %v1731
        %1827 = vmatprep.subr.mxu0 0.0
        %1828 = vmatpush1.msra.mxu0 %v1732
        %1829 = vmatprep.subr.mxu0 0.0
        %1830 = vmatpush1.msra.mxu0 %v1733
        %1831 = vmatprep.subr.mxu0 0.0
        %1832 = vmatpush1.msra.mxu0 %v1734
        %1833 = vmatprep.subr.mxu0 0.0
        %1834 = vmatpush1.msra.mxu0 %v1735
        %1835 = vmatprep.subr.mxu0 0.0
        %1836 = vmatpush1.msra.mxu0 %v1736
        %1837 = vmatprep.subr.mxu0 0.0
        %1838 = vmatpush1.msra.mxu0 %v1737
        %1839 = vmatprep.subr.mxu0 0.0
        %1840 = vmatpush1.msra.mxu0 %v1738
        %1841 = vmatprep.subr.mxu0 0.0
        %1842 = vmatpush1.msra.mxu0 %v1739
        %1843 = vmatprep.mubr.f32.mxu0 %v1705
        %1844 = vmatmul.mubr.f32.gmra.mrb[0].mxu0 %v1704
        %v1845 = vpop.f32.mrb[0].mxu0
        %v1846 = vadd.f32 %v1777, %v1845
        %v1847 = vpop.f32.mrb[0].mxu0
        %1848 = vdwg.mxu0
        %1849 = vmatprep.subr.mxu0 0.0
        %1850 = vmatpush1.msra.mxu0 %v1740
        %1851 = vmatprep.subr.mxu0 0.0
        %1852 = vmatpush1.msra.mxu0 %v1741
        %1853 = vmatprep.subr.mxu0 0.0
        %1854 = vmatpush1.msra.mxu0 %v1742
        %1855 = vmatprep.subr.mxu0 0.0
        %1856 = vmatpush1.msra.mxu0 %v1743
        %1857 = vmatprep.subr.mxu0 0.0
        %1858 = vmatpush1.msra.mxu0 %v1744
        %1859 = vmatprep.subr.mxu0 0.0
        %1860 = vmatpush1.msra.mxu0 %v1745
        %1861 = vmatprep.subr.mxu0 0.0
        %1862 = vmatpush1.msra.mxu0 %v1746
        %1863 = vmatprep.subr.mxu0 0.0
        %1864 = vmatpush1.msra.mxu0 %v1747
        %1865 = vmatprep.subr.mxu0 0.0
        %1866 = vmatpush1.msra.mxu0 %v1748
        %1867 = vmatprep.subr.mxu0 0.0
        %1868 = vmatpush1.msra.mxu0 %v1749
        %1869 = vmatprep.subr.mxu0 0.0
        %1870 = vmatpush1.msra.mxu0 %v1750
        %1871 = vmatprep.subr.mxu0 0.0
        %1872 = vmatpush1.msra.mxu0 %v1751
        %1873 = vmatprep.subr.mxu0 0.0
        %1874 = vmatpush1.msra.mxu0 %v1752
        %1875 = vmatprep.subr.mxu0 0.0
        %1876 = vmatpush1.msra.mxu0 %v1753
        %1877 = vmatprep.subr.mxu0 0.0
        %1878 = vmatpush1.msra.mxu0 %v1754
        %1879 = vmatprep.subr.mxu0 0.0
        %1880 = vmatpush1.msra.mxu0 %v1755
        %1881 = vmatprep.subr.mxu0 0.0
        %1882 = vmatpush1.msra.mxu0 %v1756
        %1883 = vmatprep.subr.mxu0 0.0
        %1884 = vmatpush1.msra.mxu0 %v1757
        %1885 = vmatprep.subr.mxu0 0.0
        %1886 = vmatpush1.msra.mxu0 %v1758
        %1887 = vmatprep.subr.mxu0 0.0
        %1888 = vmatpush1.msra.mxu0 %v1759
        %1889 = vmatprep.subr.mxu0 0.0
        %1890 = vmatpush1.msra.mxu0 %v1760
        %1891 = vmatprep.subr.mxu0 0.0
        %1892 = vmatpush1.msra.mxu0 %v1761
        %1893 = vmatprep.subr.mxu0 0.0
        %1894 = vmatpush1.msra.mxu0 %v1762
        %1895 = vmatprep.subr.mxu0 0.0
        %1896 = vmatpush1.msra.mxu0 %v1763
        %1897 = vmatprep.subr.mxu0 0.0
        %1898 = vmatpush1.msra.mxu0 %v1764
        %1899 = vmatprep.subr.mxu0 0.0
        %1900 = vmatpush1.msra.mxu0 %v1765
        %1901 = vmatprep.subr.mxu0 0.0
        %1902 = vmatpush1.msra.mxu0 %v1766
        %1903 = vmatprep.subr.mxu0 0.0
        %1904 = vmatpush1.msra.mxu0 %v1767
        %1905 = vmatprep.subr.mxu0 0.0
        %1906 = vmatpush1.msra.mxu0 %v1768
        %1907 = vmatprep.subr.mxu0 0.0
        %1908 = vmatpush1.msra.mxu0 %v1769
        %1909 = vmatprep.subr.mxu0 0.0
        %1910 = vmatpush1.msra.mxu0 %v1770
        %1911 = vmatprep.subr.mxu0 0.0
        %1912 = vmatpush1.msra.mxu0 %v1771
        %1913 = vmatprep.mubr.f32.mxu0 %v1707
        %1914 = vmatmul.mubr.f32.gmra.mrb[0].mxu0 %v1706
        %v1915 = vpop.f32.mrb[0].mxu0
        %v1916 = vadd.f32 %v1846, %v1915
        %v1917 = vpop.f32.mrb[0].mxu0
        %1918 = vdwg.mxu0
        %1919 = vst.msk [vmem:[%s536] sm:$0xff] %vm929, %v1916
        %s1920 = sand.u32 %s278, 1
        %s1921 = scalar_lea.sflag [#allocation7], %s1920
        %s1922 = sand.u32 %s278, 1
        %s1923 = smul.addr %s1922, 8
        %s1924 = scalar_lea.vmem [#allocation22], %s1923
        // Predicated region
        $region105: #{tpu_custom_call.1} parent=59 // pred_check
          %p1925 = pneg %p288
        $region106: #{tpu_custom_call.1} parent=59 // pred_check_branch
          %1927 = sbr.rel (%p1925) target = $region108
        $region107: #{tpu_custom_call.1} parent=59 // pred_region
          %s1929 = ssub.s32 128, 128
          %1930 = vsyncadd %s1921, %s1929
          %s1931 = sadd.s32 %s39, %s38
          %s1932 = smul.addr %s1931, 128
          %s1933 = scalar_lea.hbm %s10, %s1932
          %s1935 = sshll.u32 %s1924, 4
          %s1936 = int_to_ptr.vmem [resolvable:$true] %s1935
          %1938 = dma.vmem_to_hbm [thread:$0]  %s1936, 128, %s1933, %s1921
        $region108: #{tpu_custom_call.1} parent=59 // pred_fallthru
          _
      $region60: #{tpu_custom_call.1} parent=5 // pred_fallthru
        _
      %p1939 = scmp.le.s32.totalorder 2, %s29
      // Predicated region
      $region109: #{tpu_custom_call.1} parent=5 // pred_check
        %p1940 = pneg %p1939
      $region110: #{tpu_custom_call.1} parent=5 // pred_check_branch
        %1942 = sbr.rel (%p1940) target = $region112
      $region111: #{tpu_custom_call.1} parent=5 // pred_region
        %s1943 = ssub.s32 %s29, 2
        // Predicated region
        $region113: #{tpu_custom_call.1} parent=111 // pred_check
          %p1944 = pneg %p294
        $region114: #{tpu_custom_call.1} parent=111 // pred_check_branch
          %1946 = sbr.rel (%p1944) target = $region116
        $region115: #{tpu_custom_call.1} parent=111 // pred_region
          %s1947 = sand.u32 %s279, 1
          %s1948 = scalar_lea.sflag [#allocation7], %s1947
          %s1949 = sand.u32 %s279, 1
          %s1950 = smul.addr %s1949, 8
          %s1951 = scalar_lea.vmem [#allocation22], %s1950
          %1952 = dma.done %s1948, 128
        $region116: #{tpu_custom_call.1} parent=111 // pred_fallthru
          _
      $region112: #{tpu_custom_call.1} parent=5 // pred_fallthru
        _
    $region6: #{tpu_custom_call.1} parent=1 // loop_footer
      %s33 = sadd.s32 1, %s29
    $region7: #{tpu_custom_call.1} parent=1 // loop_footer_branch
      %28 = sbr.rel target = $region3
    $region8: #{tpu_custom_call.1} parent=1 // loop_exit
      _
    %1953 = vsyncpa [#allocation6], 1
    %s1954 = scalar_lea.sflag [#allocation6], 1
    %1955 = vsyncpa %s1954, 1
    %1956 = vsyncpa [#allocation9], 1
    %s1957 = scalar_lea.sflag [#allocation9], 1
    %1958 = vsyncpa %s1957, 1
    %1959 = vsyncpa [#allocation12], 1
    %1960 = vsyncpa [#allocation15], 1
    %1961 = vsyncpa [#allocation18], 1
    %1962 = vsyncpa [#allocation21], 1
    %1963 = vsyncpa [#allocation7], 1
    %s1964 = scalar_lea.sflag [#allocation7], 1
    %1965 = vsyncpa %s1964, 1

</llo_original>
